<compile_context>
chip_gen: v7x
topology: tpu7x:2x2x1
jax: 0.10.0
libtpu: 0.0.40
codegen_flags: <defaults>
</compile_context>

<pallas_src>
import functools

import jax
import jax.numpy as jnp
from jax.experimental import pallas as pl
from jax.experimental.pallas import tpu as pltpu

LN_EPS = 1e-12                      # DistilBERT LayerNorm eps
FFN_CHUNK = 512                     # FFN hidden-dim chunk width (multiple of 128)


@functools.lru_cache(maxsize=1)
def _vmem_limit_bytes():
    """Generation-aware VMEM limit: ~75% of physical, capped at 96 MiB.

    v5e/v6e (128 MiB physical) -> 96 MiB; v7x (64 MiB physical) -> 48 MiB.
    """
    cap = 64 * 1024 * 1024          # conservative fallback = v7x physical VMEM
    try:
        cap = int(getattr(pltpu.get_tpu_info(), "vmem_capacity_bytes", cap))
    except Exception:
        pass
    return min((cap * 3) // 4, 96 * 1024 * 1024)


def _ln(x, g, b):
    mu = jnp.mean(x, axis=-1, keepdims=True)
    var = jnp.mean((x - mu) ** 2, axis=-1, keepdims=True)
    return (x - mu) * jax.lax.rsqrt(var + LN_EPS) * g + b


# ---------------------------------------------------------------------------
# Fused transformer-layer kernel (attention + FFN + both LayerNorms,
# optionally also the embedding LayerNorm for the first layer).
# ---------------------------------------------------------------------------
def _layer_kernel(x_ref, mask_ref, gin_ref, bin_ref,
                  wqkv_ref, bqkv_ref, wo_ref, bo_ref,
                  g1_ref, e1_ref, w1_ref, b1_ref, w2_ref, b2_ref, g2_ref, e2_ref,
                  o_ref, ctx_ref, *, n_heads, fuse_input_ln):
    x = x_ref[0].astype(jnp.float32)              # (S, D) bf16 in HBM -> f32 math
    if fuse_input_ln:                             # static: embedding LN fused here
        x = _ln(x, gin_ref[...], bin_ref[...])
    mask = mask_ref[0]                            # (1, S) f32 — 1 = keep, 0 = pad
    S, D = x.shape
    hd = D // n_heads
    scale = 1.0 / float(hd) ** 0.5

    # --- fused QKV projection: one bf16 MXU matmul, f32 accumulate ----------
    xb = x.astype(jnp.bfloat16)
    qkv = jnp.dot(xb, wqkv_ref[...],
                  preferred_element_type=jnp.float32) + bqkv_ref[...]
    qb = (qkv[:, :D] * scale).astype(jnp.bfloat16)   # fold 1/sqrt(hd) into Q once
    kb = qkv[:, D:2 * D].astype(jnp.bfloat16)
    vb = qkv[:, 2 * D:].astype(jnp.bfloat16)

    # Additive key-mask bias, broadcast to (S, S) ONCE (hoisted out of the head
    # loop — JAX does not CSE broadcast_in_dim).  Padding-only rows degrade to
    # a uniform softmax (finite); only token 0 is ultimately returned.
    bias = jnp.broadcast_to((mask - 1.0) * jnp.float32(1e30), (S, S))

    # --- per-head attention; ctx written straight into a bf16 VMEM scratch. --
    # TODO(synk): a fully batched (H, S, hd) head relayout would lift the
    # K=hd=64 matmuls to full MXU width, and a lax.fori_loop would bound live
    # ranges; both need Mosaic relayout / dynamic-lane-slice support, so the
    # static head loop is kept (H is small).  A fold-of-wo-into-the-head-loop
    # variant (attn += ctx_h @ wo[lo:lo+hd]) is worth benchmarking on v6e.
    for h in range(n_heads):
        lo = h * hd
        qh = qb[:, lo:lo + hd]
        kh = kb[:, lo:lo + hd]
        vh = vb[:, lo:lo + hd]
        # scores (S, S) = (qh/sqrt(hd)) @ kh^T, contracting last dims
        s = jax.lax.dot_general(qh, kh, (((1,), (1,)), ((), ())),
                                preferred_element_type=jnp.float32) + bias
        s = s - jnp.max(s, axis=-1, keepdims=True)
        p = jnp.exp(s.astype(jnp.bfloat16))       # bf16 EUP exp (v6e/v7x)
        r = pl.reciprocal(jnp.sum(p, axis=-1, keepdims=True, dtype=jnp.float32),
                          approx=True)
        # Normalize AFTER P@V: S*hd multiplies instead of S*S per head.
        ctx_raw = jnp.dot(p, vh, preferred_element_type=jnp.float32)
        ctx_ref[:, lo:lo + hd] = (ctx_raw * r).astype(jnp.bfloat16)

    ctx = ctx_ref[...]                            # (S, D) bf16

    # --- output projection + residual + sa_layer_norm -----------------------
    attn = jnp.dot(ctx, wo_ref[...],
                   preferred_element_type=jnp.float32) + bo_ref[...]
    h1 = _ln(x + attn, g1_ref[...], e1_ref[...])
    h1b = h1.astype(jnp.bfloat16)

    # --- FFN (chunked over the hidden dim) + residual + output_layer_norm ----
    # Never materializes the full (S, FFN) f32 intermediate: per-chunk GELU and
    # accumulate the matching w2 row block into an (S, D) f32 accumulator.
    F = w1_ref.shape[1]
    chunk = min(FFN_CHUNK, F)
    ffn = jnp.zeros((S, D), jnp.float32)
    for lo_f in range(0, F, chunk):
        hi = min(F, lo_f + chunk)
        f = jnp.dot(h1b, w1_ref[:, lo_f:hi],
                    preferred_element_type=jnp.float32) + b1_ref[:, lo_f:hi]
        # TODO(synk): HF DistilBERT uses exact erf GELU; tanh-approx GELU kept
        # because lax.erf is not reliably lowered inside Mosaic kernels.
        f = jax.nn.gelu(f)
        ffn = ffn + jnp.dot(f.astype(jnp.bfloat16), w2_ref[lo_f:hi, :],
                            preferred_element_type=jnp.float32)
    o_ref[0] = _ln(h1 + ffn + b2_ref[...],
                   g2_ref[...], e2_ref[...]).astype(o_ref.dtype)


# ---------------------------------------------------------------------------
# Wrapper
# ---------------------------------------------------------------------------
def _const_spec(shape):
    """Grid-invariant block: constant index_map, single pipeline buffer."""
    idx = lambda i, _n=len(shape): (0,) * _n
    try:
        return pl.BlockSpec(shape, idx, pipeline_mode=pl.Buffered(1))
    except TypeError:   # older jax without pipeline_mode kwarg
        return pl.BlockSpec(shape, idx)


def transformer_layer(x, mask3, emb_g, emb_b, lp, n_heads, fuse_input_ln):
    B, S, D = x.shape
    weights = [lp["wqkv"], lp["bqkv"], lp["wo"], lp["bo"],
               lp["ln1_g"], lp["ln1_b"],
               lp["w1"], lp["b1"], lp["w2"], lp["b2"],
               lp["ln2_g"], lp["ln2_b"]]
    w_specs = [_const_spec(w.shape) for w in weights]
    ln_specs = [_const_spec(emb_g.shape), _const_spec(emb_b.shape)]
    # TODO(synk): for B == 1 deployments on v7x, add a second "parallel" grid
    # axis over query-row tiles so both TensorCores are used.
    return pl.pallas_call(
        functools.partial(_layer_kernel, n_heads=n_heads,
                          fuse_input_ln=fuse_input_ln),
        out_shape=jax.ShapeDtypeStruct((B, S, D), jnp.bfloat16),
        grid=(B,),
        in_specs=[pl.BlockSpec((1, S, D), lambda i: (i, 0, 0)),
                  pl.BlockSpec((1, 1, S), lambda i: (i, 0, 0))] + ln_specs + w_specs,
        out_specs=pl.BlockSpec((1, S, D), lambda i: (i, 0, 0)),
        scratch_shapes=[pltpu.VMEM((S, D), jnp.bfloat16)],   # per-head ctx slab
        compiler_params=pltpu.CompilerParams(
            dimension_semantics=("parallel",),
            vmem_limit_bytes=_vmem_limit_bytes()),
    )(x, mask3, emb_g, emb_b, *weights)


def text_encoder_forward(params, input_ids, attention_mask):
    """Returns CLS-token embedding (B, D) — matches last_hidden_state[:, 0, :]."""
    B, S = input_ids.shape
    pos = jnp.arange(S)
    # Embedding gather (glue, plain JAX); the embedding LayerNorm is fused into
    # the first transformer-layer kernel (no standalone LN pallas_call).
    x = params["word_emb"][input_ids] + params["pos_emb"][pos][None, :, :]
    x = x.astype(jnp.bfloat16)          # inter-layer activations carried in bf16
    mask3 = attention_mask.astype(jnp.float32).reshape(B, 1, S)
    for li, lp in enumerate(params["layers"]):
        x = transformer_layer(x, mask3, params["emb_ln_g"], params["emb_ln_b"],
                              lp, n_heads=params["n_heads"],
                              fuse_input_ln=(li == 0))
    # Dropout layers are identity in eval mode (weights frozen / inference).
    return x[:, 0, :].astype(jnp.float32)   # target_token_idx = 0


# ---------------------------------------------------------------------------
# Deterministic parameter init (synthetic — no checkpoint loading).
# Matmul weights stored in bf16 (MXU-native, half the HBM/VMEM traffic);
# Q/K/V weights pre-packed into a single (D, 3D) matrix; biases / LayerNorm
# params stay f32.
# ---------------------------------------------------------------------------
def init_params(key, vocab, max_pos, dim, n_heads, ffn_dim, n_layers):
    def nrm(k, shape, scale=0.02):
        return scale * jax.random.normal(k, shape, jnp.float32)

    def nrm16(k, shape):
        return nrm(k, shape).astype(jnp.bfloat16)

    keys = jax.random.split(key, 3 + n_layers)
    params = {
        "n_heads": n_heads,
        "word_emb": nrm(keys[0], (vocab, dim)),
        "pos_emb": nrm(keys[1], (max_pos, dim)),
        "emb_ln_g": jnp.ones((1, dim), jnp.float32),
        "emb_ln_b": jnp.zeros((1, dim), jnp.float32),
        "layers": [],
    }
    for l in range(n_layers):
        lk = jax.random.split(keys[3 + l], 6)
        wq = nrm16(lk[0], (dim, dim))
        wk = nrm16(lk[1], (dim, dim))
        wv = nrm16(lk[2], (dim, dim))
        params["layers"].append({
            "wqkv": jnp.concatenate([wq, wk, wv], axis=1),           # (D, 3D) bf16
            "bqkv": jnp.zeros((1, 3 * dim), jnp.float32),
            "wo": nrm16(lk[3], (dim, dim)), "bo": jnp.zeros((1, dim), jnp.float32),
            "ln1_g": jnp.ones((1, dim), jnp.float32),
            "ln1_b": jnp.zeros((1, dim), jnp.float32),
            "w1": nrm16(lk[4], (dim, ffn_dim)),
            "b1": jnp.zeros((1, ffn_dim), jnp.float32),
            "w2": nrm16(lk[5], (ffn_dim, dim)),
            "b2": jnp.zeros((1, dim), jnp.float32),
            "ln2_g": jnp.ones((1, dim), jnp.float32),
            "ln2_b": jnp.zeros((1, dim), jnp.float32),
        })
    return params


if __name__ == "__main__":
    B, S = 2, 8
    VOCAB, MAX_POS, DIM, HEADS, FFN, LAYERS = 100, 32, 32, 4, 64, 2

    key = jax.random.PRNGKey(0)
    k_param, k_ids = jax.random.split(key)
    params = init_params(k_param, VOCAB, MAX_POS, DIM, HEADS, FFN, LAYERS)

    input_ids = jax.random.randint(k_ids, (B, S), 0, VOCAB, dtype=jnp.int32)
    attention_mask = jnp.ones((B, S), jnp.float32).at[1, 6:].set(0.0)  # pad tail of seq 1

    cls_emb = text_encoder_forward(params, input_ids, attention_mask)
    jax.block_until_ready(cls_emb)

    assert cls_emb.shape == (B, DIM) and cls_emb.dtype == jnp.float32
    assert bool(jnp.all(jnp.isfinite(cls_emb)))
    print("KERNEL_OK")
</pallas_src>

<mosaic_0001>
module attributes {stable_mosaic.version = 11 : i64} {
  func.func @_layer_kernel(%arg0: i32, %arg1: memref<1x8x32xbf16, #tpu.memory_space<vmem>>, %arg2: memref<1x1x8xf32, #tpu.memory_space<vmem>>, %arg3: memref<1x32xf32, #tpu.memory_space<vmem>>, %arg4: memref<1x32xf32, #tpu.memory_space<vmem>>, %arg5: memref<32x96xbf16, #tpu.memory_space<vmem>>, %arg6: memref<1x96xf32, #tpu.memory_space<vmem>>, %arg7: memref<32x32xbf16, #tpu.memory_space<vmem>>, %arg8: memref<1x32xf32, #tpu.memory_space<vmem>>, %arg9: memref<1x32xf32, #tpu.memory_space<vmem>>, %arg10: memref<1x32xf32, #tpu.memory_space<vmem>>, %arg11: memref<32x64xbf16, #tpu.memory_space<vmem>>, %arg12: memref<1x64xf32, #tpu.memory_space<vmem>>, %arg13: memref<64x32xbf16, #tpu.memory_space<vmem>>, %arg14: memref<1x32xf32, #tpu.memory_space<vmem>>, %arg15: memref<1x32xf32, #tpu.memory_space<vmem>>, %arg16: memref<1x32xf32, #tpu.memory_space<vmem>>, %arg17: memref<1x8x32xbf16, #tpu.memory_space<vmem>>, %arg18: memref<8x32xbf16, #tpu.memory_space<vmem>>) attributes {dimension_semantics = [#tpu.dimension_semantics<parallel>], iteration_bounds = array<i64: 2>, scalar_prefetch = 0 : i64, scratch_operands = 1 : i64, tpu.core_type = #tpu.core_type<tc>, window_params = [{transform_indices = @transform_0, window_bounds = array<i64: 1, 8, 32>}, {transform_indices = @transform_1, window_bounds = array<i64: 1, 1, 8>}, {pipeline_mode = #tpu.pipeline_mode<synchronous>, transform_indices = @transform_2, window_bounds = array<i64: 1, 32>}, {pipeline_mode = #tpu.pipeline_mode<synchronous>, transform_indices = @transform_3, window_bounds = array<i64: 1, 32>}, {pipeline_mode = #tpu.pipeline_mode<synchronous>, transform_indices = @transform_4, window_bounds = array<i64: 32, 96>}, {pipeline_mode = #tpu.pipeline_mode<synchronous>, transform_indices = @transform_5, window_bounds = array<i64: 1, 96>}, {pipeline_mode = #tpu.pipeline_mode<synchronous>, transform_indices = @transform_6, window_bounds = array<i64: 32, 32>}, {pipeline_mode = #tpu.pipeline_mode<synchronous>, transform_indices = @transform_7, window_bounds = array<i64: 1, 32>}, {pipeline_mode = #tpu.pipeline_mode<synchronous>, transform_indices = @transform_8, window_bounds = array<i64: 1, 32>}, {pipeline_mode = #tpu.pipeline_mode<synchronous>, transform_indices = @transform_9, window_bounds = array<i64: 1, 32>}, {pipeline_mode = #tpu.pipeline_mode<synchronous>, transform_indices = @transform_10, window_bounds = array<i64: 32, 64>}, {pipeline_mode = #tpu.pipeline_mode<synchronous>, transform_indices = @transform_11, window_bounds = array<i64: 1, 64>}, {pipeline_mode = #tpu.pipeline_mode<synchronous>, transform_indices = @transform_12, window_bounds = array<i64: 64, 32>}, {pipeline_mode = #tpu.pipeline_mode<synchronous>, transform_indices = @transform_13, window_bounds = array<i64: 1, 32>}, {pipeline_mode = #tpu.pipeline_mode<synchronous>, transform_indices = @transform_14, window_bounds = array<i64: 1, 32>}, {pipeline_mode = #tpu.pipeline_mode<synchronous>, transform_indices = @transform_15, window_bounds = array<i64: 1, 32>}, {transform_indices = @transform_16, window_bounds = array<i64: 1, 8, 32>}]} {
    %c0 = arith.constant 0 : index
    %c0_0 = arith.constant 0 : index
    %c0_1 = arith.constant 0 : index
    %0 = vector.load %arg1[%c0, %c0_0, %c0_1] : memref<1x8x32xbf16, #tpu.memory_space<vmem>>, vector<1x8x32xbf16>
    %1 = vector.shape_cast %0 : vector<1x8x32xbf16> to vector<8x32xbf16>
    %2 = arith.extf %1 : vector<8x32xbf16> to vector<8x32xf32>
    %c0_2 = arith.constant 0 : index
    %c0_3 = arith.constant 0 : index
    %3 = vector.load %arg3[%c0_2, %c0_3] : memref<1x32xf32, #tpu.memory_space<vmem>>, vector<1x32xf32>
    %c0_4 = arith.constant 0 : index
    %c0_5 = arith.constant 0 : index
    %4 = vector.load %arg4[%c0_4, %c0_5] : memref<1x32xf32, #tpu.memory_space<vmem>>, vector<1x32xf32>
    %cst = arith.constant dense<0.000000e+00> : vector<8xf32>
    %5 = vector.multi_reduction <add>, %2, %cst [1] : vector<8x32xf32> to vector<8xf32>
    %6 = vector.shape_cast %5 : vector<8xf32> to vector<8x1xf32>
    %cst_6 = arith.constant 3.200000e+01 : f32
    %7 = vector.broadcast %cst_6 : f32 to vector<8x1xf32>
    %8 = arith.divf %6, %7 : vector<8x1xf32>
    %9 = vector.broadcast %8 : vector<8x1xf32> to vector<8x32xf32>
    %10 = arith.subf %2, %9 : vector<8x32xf32>
    %11 = arith.mulf %10, %10 : vector<8x32xf32>
    %cst_7 = arith.constant dense<0.000000e+00> : vector<8xf32>
    %12 = vector.multi_reduction <add>, %11, %cst_7 [1] : vector<8x32xf32> to vector<8xf32>
    %13 = vector.shape_cast %12 : vector<8xf32> to vector<8x1xf32>
    %cst_8 = arith.constant 3.200000e+01 : f32
    %14 = vector.broadcast %cst_8 : f32 to vector<8x1xf32>
    %15 = arith.divf %13, %14 : vector<8x1xf32>
    %16 = vector.broadcast %8 : vector<8x1xf32> to vector<8x32xf32>
    %17 = arith.subf %2, %16 : vector<8x32xf32>
    %cst_9 = arith.constant 9.99999996E-13 : f32
    %18 = vector.broadcast %cst_9 : f32 to vector<8x1xf32>
    %19 = arith.addf %15, %18 : vector<8x1xf32>
    %20 = math.rsqrt %19 : vector<8x1xf32>
    %21 = vector.broadcast %20 : vector<8x1xf32> to vector<8x32xf32>
    %22 = arith.mulf %17, %21 : vector<8x32xf32>
    %23 = vector.broadcast %3 : vector<1x32xf32> to vector<8x32xf32>
    %24 = arith.mulf %22, %23 : vector<8x32xf32>
    %25 = vector.broadcast %4 : vector<1x32xf32> to vector<8x32xf32>
    %26 = arith.addf %24, %25 : vector<8x32xf32>
    %c0_10 = arith.constant 0 : index
    %c0_11 = arith.constant 0 : index
    %c0_12 = arith.constant 0 : index
    %27 = vector.load %arg2[%c0_10, %c0_11, %c0_12] : memref<1x1x8xf32, #tpu.memory_space<vmem>>, vector<1x1x8xf32>
    %28 = vector.shape_cast %27 : vector<1x1x8xf32> to vector<1x8xf32>
    %29 = arith.truncf %26 : vector<8x32xf32> to vector<8x32xbf16>
    %c0_13 = arith.constant 0 : index
    %c0_14 = arith.constant 0 : index
    %30 = vector.load %arg5[%c0_13, %c0_14] : memref<32x96xbf16, #tpu.memory_space<vmem>>, vector<32x96xbf16>
    %cst_15 = arith.constant dense<0.000000e+00> : vector<8x96xf32>
    %31 = tpu.matmul %29, %30, %cst_15 {dimension_numbers = #tpu.dot_dimension_numbers<[1], [0], [0], [1], [0, 0, 1, 1], [], []>} : vector<8x32xbf16>, vector<32x96xbf16>, vector<8x96xf32> -> vector<8x96xf32>
    %c0_16 = arith.constant 0 : index
    %c0_17 = arith.constant 0 : index
    %32 = vector.load %arg6[%c0_16, %c0_17] : memref<1x96xf32, #tpu.memory_space<vmem>>, vector<1x96xf32>
    %33 = vector.broadcast %32 : vector<1x96xf32> to vector<8x96xf32>
    %34 = arith.addf %31, %33 : vector<8x96xf32>
    %35 = vector.extract_strided_slice %34 {offsets = [0, 0], sizes = [8, 32], strides = [1, 1]} : vector<8x96xf32> to vector<8x32xf32>
    %cst_18 = arith.constant 0.353553385 : f32
    %36 = vector.broadcast %cst_18 : f32 to vector<8x32xf32>
    %37 = arith.mulf %35, %36 : vector<8x32xf32>
    %38 = arith.truncf %37 : vector<8x32xf32> to vector<8x32xbf16>
    %39 = vector.extract_strided_slice %34 {offsets = [0, 32], sizes = [8, 32], strides = [1, 1]} : vector<8x96xf32> to vector<8x32xf32>
    %40 = arith.truncf %39 : vector<8x32xf32> to vector<8x32xbf16>
    %41 = vector.extract_strided_slice %34 {offsets = [0, 64], sizes = [8, 32], strides = [1, 1]} : vector<8x96xf32> to vector<8x32xf32>
    %42 = arith.truncf %41 : vector<8x32xf32> to vector<8x32xbf16>
    %cst_19 = arith.constant 1.000000e+00 : f32
    %43 = vector.broadcast %cst_19 : f32 to vector<1x8xf32>
    %44 = arith.subf %28, %43 : vector<1x8xf32>
    %cst_20 = arith.constant 1.000000e+30 : f32
    %45 = vector.broadcast %cst_20 : f32 to vector<1x8xf32>
    %46 = arith.mulf %44, %45 : vector<1x8xf32>
    %47 = vector.shape_cast %46 : vector<1x8xf32> to vector<1x8xf32>
    %48 = vector.broadcast %47 : vector<1x8xf32> to vector<8x8xf32>
    %49 = vector.extract_strided_slice %38 {offsets = [0, 0], sizes = [8, 8], strides = [1, 1]} : vector<8x32xbf16> to vector<8x8xbf16>
    %50 = vector.extract_strided_slice %40 {offsets = [0, 0], sizes = [8, 8], strides = [1, 1]} : vector<8x32xbf16> to vector<8x8xbf16>
    %51 = vector.extract_strided_slice %42 {offsets = [0, 0], sizes = [8, 8], strides = [1, 1]} : vector<8x32xbf16> to vector<8x8xbf16>
    %cst_21 = arith.constant dense<0.000000e+00> : vector<8x8xf32>
    %52 = tpu.matmul %49, %50, %cst_21 {dimension_numbers = #tpu.dot_dimension_numbers<[1], [1], [0], [0], [0, 0, 1, 0], [], []>} : vector<8x8xbf16>, vector<8x8xbf16>, vector<8x8xf32> -> vector<8x8xf32>
    %53 = arith.addf %52, %48 : vector<8x8xf32>
    %cst_22 = arith.constant dense<0xFF800000> : vector<8xf32>
    %54 = vector.multi_reduction <maximumf>, %53, %cst_22 [1] : vector<8x8xf32> to vector<8xf32>
    %55 = vector.shape_cast %54 : vector<8xf32> to vector<8x1xf32>
    %56 = vector.broadcast %55 : vector<8x1xf32> to vector<8x8xf32>
    %57 = arith.subf %53, %56 : vector<8x8xf32>
    %58 = arith.truncf %57 : vector<8x8xf32> to vector<8x8xbf16>
    %59 = math.exp %58 : vector<8x8xbf16>
    %60 = arith.extf %59 : vector<8x8xbf16> to vector<8x8xf32>
    %cst_23 = arith.constant dense<0.000000e+00> : vector<8xf32>
    %61 = vector.multi_reduction <add>, %60, %cst_23 [1] : vector<8x8xf32> to vector<8xf32>
    %62 = vector.shape_cast %61 : vector<8xf32> to vector<8x1xf32>
    %63 = tpu.reciprocal %62 {approx = true} : vector<8x1xf32> -> vector<8x1xf32>
    %cst_24 = arith.constant dense<0.000000e+00> : vector<8x8xf32>
    %64 = tpu.matmul %59, %51, %cst_24 {dimension_numbers = #tpu.dot_dimension_numbers<[1], [0], [0], [1], [0, 0, 1, 1], [], []>} : vector<8x8xbf16>, vector<8x8xbf16>, vector<8x8xf32> -> vector<8x8xf32>
    %65 = vector.broadcast %63 : vector<8x1xf32> to vector<8x8xf32>
    %66 = arith.mulf %64, %65 : vector<8x8xf32>
    %67 = arith.truncf %66 : vector<8x8xf32> to vector<8x8xbf16>
    %c0_25 = arith.constant 0 : index
    %c0_26 = arith.constant 0 : index
    %68 = vector.load %arg18[%c0_25, %c0_26] : memref<8x32xbf16, #tpu.memory_space<vmem>>, vector<8x8xbf16>
    tpu.vector_store %arg18[%c0_25, %c0_26], %67 {strides = array<i32>} : memref<8x32xbf16, #tpu.memory_space<vmem>>, vector<8x8xbf16>,
    %69 = vector.extract_strided_slice %38 {offsets = [0, 8], sizes = [8, 8], strides = [1, 1]} : vector<8x32xbf16> to vector<8x8xbf16>
    %70 = vector.extract_strided_slice %40 {offsets = [0, 8], sizes = [8, 8], strides = [1, 1]} : vector<8x32xbf16> to vector<8x8xbf16>
    %71 = vector.extract_strided_slice %42 {offsets = [0, 8], sizes = [8, 8], strides = [1, 1]} : vector<8x32xbf16> to vector<8x8xbf16>
    %cst_27 = arith.constant dense<0.000000e+00> : vector<8x8xf32>
    %72 = tpu.matmul %69, %70, %cst_27 {dimension_numbers = #tpu.dot_dimension_numbers<[1], [1], [0], [0], [0, 0, 1, 0], [], []>} : vector<8x8xbf16>, vector<8x8xbf16>, vector<8x8xf32> -> vector<8x8xf32>
    %73 = arith.addf %72, %48 : vector<8x8xf32>
    %cst_28 = arith.constant dense<0xFF800000> : vector<8xf32>
    %74 = vector.multi_reduction <maximumf>, %73, %cst_28 [1] : vector<8x8xf32> to vector<8xf32>
    %75 = vector.shape_cast %74 : vector<8xf32> to vector<8x1xf32>
    %76 = vector.broadcast %75 : vector<8x1xf32> to vector<8x8xf32>
    %77 = arith.subf %73, %76 : vector<8x8xf32>
    %78 = arith.truncf %77 : vector<8x8xf32> to vector<8x8xbf16>
    %79 = math.exp %78 : vector<8x8xbf16>
    %80 = arith.extf %79 : vector<8x8xbf16> to vector<8x8xf32>
    %cst_29 = arith.constant dense<0.000000e+00> : vector<8xf32>
    %81 = vector.multi_reduction <add>, %80, %cst_29 [1] : vector<8x8xf32> to vector<8xf32>
    %82 = vector.shape_cast %81 : vector<8xf32> to vector<8x1xf32>
    %83 = tpu.reciprocal %82 {approx = true} : vector<8x1xf32> -> vector<8x1xf32>
    %cst_30 = arith.constant dense<0.000000e+00> : vector<8x8xf32>
    %84 = tpu.matmul %79, %71, %cst_30 {dimension_numbers = #tpu.dot_dimension_numbers<[1], [0], [0], [1], [0, 0, 1, 1], [], []>} : vector<8x8xbf16>, vector<8x8xbf16>, vector<8x8xf32> -> vector<8x8xf32>
    %85 = vector.broadcast %83 : vector<8x1xf32> to vector<8x8xf32>
    %86 = arith.mulf %84, %85 : vector<8x8xf32>
    %87 = arith.truncf %86 : vector<8x8xf32> to vector<8x8xbf16>
    %c0_31 = arith.constant 0 : index
    %c8 = arith.constant 8 : index
    %88 = vector.load %arg18[%c0_31, %c8] : memref<8x32xbf16, #tpu.memory_space<vmem>>, vector<8x8xbf16>
    tpu.vector_store %arg18[%c0_31, %c8], %87 {strides = array<i32>} : memref<8x32xbf16, #tpu.memory_space<vmem>>, vector<8x8xbf16>,
    %89 = vector.extract_strided_slice %38 {offsets = [0, 16], sizes = [8, 8], strides = [1, 1]} : vector<8x32xbf16> to vector<8x8xbf16>
    %90 = vector.extract_strided_slice %40 {offsets = [0, 16], sizes = [8, 8], strides = [1, 1]} : vector<8x32xbf16> to vector<8x8xbf16>
    %91 = vector.extract_strided_slice %42 {offsets = [0, 16], sizes = [8, 8], strides = [1, 1]} : vector<8x32xbf16> to vector<8x8xbf16>
    %cst_32 = arith.constant dense<0.000000e+00> : vector<8x8xf32>
    %92 = tpu.matmul %89, %90, %cst_32 {dimension_numbers = #tpu.dot_dimension_numbers<[1], [1], [0], [0], [0, 0, 1, 0], [], []>} : vector<8x8xbf16>, vector<8x8xbf16>, vector<8x8xf32> -> vector<8x8xf32>
    %93 = arith.addf %92, %48 : vector<8x8xf32>
    %cst_33 = arith.constant dense<0xFF800000> : vector<8xf32>
    %94 = vector.multi_reduction <maximumf>, %93, %cst_33 [1] : vector<8x8xf32> to vector<8xf32>
    %95 = vector.shape_cast %94 : vector<8xf32> to vector<8x1xf32>
    %96 = vector.broadcast %95 : vector<8x1xf32> to vector<8x8xf32>
    %97 = arith.subf %93, %96 : vector<8x8xf32>
    %98 = arith.truncf %97 : vector<8x8xf32> to vector<8x8xbf16>
    %99 = math.exp %98 : vector<8x8xbf16>
    %100 = arith.extf %99 : vector<8x8xbf16> to vector<8x8xf32>
    %cst_34 = arith.constant dense<0.000000e+00> : vector<8xf32>
    %101 = vector.multi_reduction <add>, %100, %cst_34 [1] : vector<8x8xf32> to vector<8xf32>
    %102 = vector.shape_cast %101 : vector<8xf32> to vector<8x1xf32>
    %103 = tpu.reciprocal %102 {approx = true} : vector<8x1xf32> -> vector<8x1xf32>
    %cst_35 = arith.constant dense<0.000000e+00> : vector<8x8xf32>
    %104 = tpu.matmul %99, %91, %cst_35 {dimension_numbers = #tpu.dot_dimension_numbers<[1], [0], [0], [1], [0, 0, 1, 1], [], []>} : vector<8x8xbf16>, vector<8x8xbf16>, vector<8x8xf32> -> vector<8x8xf32>
    %105 = vector.broadcast %103 : vector<8x1xf32> to vector<8x8xf32>
    %106 = arith.mulf %104, %105 : vector<8x8xf32>
    %107 = arith.truncf %106 : vector<8x8xf32> to vector<8x8xbf16>
    %c0_36 = arith.constant 0 : index
    %c16 = arith.constant 16 : index
    %108 = vector.load %arg18[%c0_36, %c16] : memref<8x32xbf16, #tpu.memory_space<vmem>>, vector<8x8xbf16>
    tpu.vector_store %arg18[%c0_36, %c16], %107 {strides = array<i32>} : memref<8x32xbf16, #tpu.memory_space<vmem>>, vector<8x8xbf16>,
    %109 = vector.extract_strided_slice %38 {offsets = [0, 24], sizes = [8, 8], strides = [1, 1]} : vector<8x32xbf16> to vector<8x8xbf16>
    %110 = vector.extract_strided_slice %40 {offsets = [0, 24], sizes = [8, 8], strides = [1, 1]} : vector<8x32xbf16> to vector<8x8xbf16>
    %111 = vector.extract_strided_slice %42 {offsets = [0, 24], sizes = [8, 8], strides = [1, 1]} : vector<8x32xbf16> to vector<8x8xbf16>
    %cst_37 = arith.constant dense<0.000000e+00> : vector<8x8xf32>
    %112 = tpu.matmul %109, %110, %cst_37 {dimension_numbers = #tpu.dot_dimension_numbers<[1], [1], [0], [0], [0, 0, 1, 0], [], []>} : vector<8x8xbf16>, vector<8x8xbf16>, vector<8x8xf32> -> vector<8x8xf32>
    %113 = arith.addf %112, %48 : vector<8x8xf32>
    %cst_38 = arith.constant dense<0xFF800000> : vector<8xf32>
    %114 = vector.multi_reduction <maximumf>, %113, %cst_38 [1] : vector<8x8xf32> to vector<8xf32>
    %115 = vector.shape_cast %114 : vector<8xf32> to vector<8x1xf32>
    %116 = vector.broadcast %115 : vector<8x1xf32> to vector<8x8xf32>
    %117 = arith.subf %113, %116 : vector<8x8xf32>
    %118 = arith.truncf %117 : vector<8x8xf32> to vector<8x8xbf16>
    %119 = math.exp %118 : vector<8x8xbf16>
    %120 = arith.extf %119 : vector<8x8xbf16> to vector<8x8xf32>
    %cst_39 = arith.constant dense<0.000000e+00> : vector<8xf32>
    %121 = vector.multi_reduction <add>, %120, %cst_39 [1] : vector<8x8xf32> to vector<8xf32>
    %122 = vector.shape_cast %121 : vector<8xf32> to vector<8x1xf32>
    %123 = tpu.reciprocal %122 {approx = true} : vector<8x1xf32> -> vector<8x1xf32>
    %cst_40 = arith.constant dense<0.000000e+00> : vector<8x8xf32>
    %124 = tpu.matmul %119, %111, %cst_40 {dimension_numbers = #tpu.dot_dimension_numbers<[1], [0], [0], [1], [0, 0, 1, 1], [], []>} : vector<8x8xbf16>, vector<8x8xbf16>, vector<8x8xf32> -> vector<8x8xf32>
    %125 = vector.broadcast %123 : vector<8x1xf32> to vector<8x8xf32>
    %126 = arith.mulf %124, %125 : vector<8x8xf32>
    %127 = arith.truncf %126 : vector<8x8xf32> to vector<8x8xbf16>
    %c0_41 = arith.constant 0 : index
    %c24 = arith.constant 24 : index
    %128 = vector.load %arg18[%c0_41, %c24] : memref<8x32xbf16, #tpu.memory_space<vmem>>, vector<8x8xbf16>
    tpu.vector_store %arg18[%c0_41, %c24], %127 {strides = array<i32>} : memref<8x32xbf16, #tpu.memory_space<vmem>>, vector<8x8xbf16>,
    %c0_42 = arith.constant 0 : index
    %c0_43 = arith.constant 0 : index
    %129 = vector.load %arg18[%c0_42, %c0_43] : memref<8x32xbf16, #tpu.memory_space<vmem>>, vector<8x32xbf16>
    %c0_44 = arith.constant 0 : index
    %c0_45 = arith.constant 0 : index
    %130 = vector.load %arg7[%c0_44, %c0_45] : memref<32x32xbf16, #tpu.memory_space<vmem>>, vector<32x32xbf16>
    %cst_46 = arith.constant dense<0.000000e+00> : vector<8x32xf32>
    %131 = tpu.matmul %129, %130, %cst_46 {dimension_numbers = #tpu.dot_dimension_numbers<[1], [0], [0], [1], [0, 0, 1, 1], [], []>} : vector<8x32xbf16>, vector<32x32xbf16>, vector<8x32xf32> -> vector<8x32xf32>
    %c0_47 = arith.constant 0 : index
    %c0_48 = arith.constant 0 : index
    %132 = vector.load %arg8[%c0_47, %c0_48] : memref<1x32xf32, #tpu.memory_space<vmem>>, vector<1x32xf32>
    %133 = vector.broadcast %132 : vector<1x32xf32> to vector<8x32xf32>
    %134 = arith.addf %131, %133 : vector<8x32xf32>
    %135 = arith.addf %26, %134 : vector<8x32xf32>
    %c0_49 = arith.constant 0 : index
    %c0_50 = arith.constant 0 : index
    %136 = vector.load %arg9[%c0_49, %c0_50] : memref<1x32xf32, #tpu.memory_space<vmem>>, vector<1x32xf32>
    %c0_51 = arith.constant 0 : index
    %c0_52 = arith.constant 0 : index
    %137 = vector.load %arg10[%c0_51, %c0_52] : memref<1x32xf32, #tpu.memory_space<vmem>>, vector<1x32xf32>
    %cst_53 = arith.constant dense<0.000000e+00> : vector<8xf32>
    %138 = vector.multi_reduction <add>, %135, %cst_53 [1] : vector<8x32xf32> to vector<8xf32>
    %139 = vector.shape_cast %138 : vector<8xf32> to vector<8x1xf32>
    %cst_54 = arith.constant 3.200000e+01 : f32
    %140 = vector.broadcast %cst_54 : f32 to vector<8x1xf32>
    %141 = arith.divf %139, %140 : vector<8x1xf32>
    %142 = vector.broadcast %141 : vector<8x1xf32> to vector<8x32xf32>
    %143 = arith.subf %135, %142 : vector<8x32xf32>
    %144 = arith.mulf %143, %143 : vector<8x32xf32>
    %cst_55 = arith.constant dense<0.000000e+00> : vector<8xf32>
    %145 = vector.multi_reduction <add>, %144, %cst_55 [1] : vector<8x32xf32> to vector<8xf32>
    %146 = vector.shape_cast %145 : vector<8xf32> to vector<8x1xf32>
    %cst_56 = arith.constant 3.200000e+01 : f32
    %147 = vector.broadcast %cst_56 : f32 to vector<8x1xf32>
    %148 = arith.divf %146, %147 : vector<8x1xf32>
    %149 = vector.broadcast %141 : vector<8x1xf32> to vector<8x32xf32>
    %150 = arith.subf %135, %149 : vector<8x32xf32>
    %cst_57 = arith.constant 9.99999996E-13 : f32
    %151 = vector.broadcast %cst_57 : f32 to vector<8x1xf32>
    %152 = arith.addf %148, %151 : vector<8x1xf32>
    %153 = math.rsqrt %152 : vector<8x1xf32>
    %154 = vector.broadcast %153 : vector<8x1xf32> to vector<8x32xf32>
    %155 = arith.mulf %150, %154 : vector<8x32xf32>
    %156 = vector.broadcast %136 : vector<1x32xf32> to vector<8x32xf32>
    %157 = arith.mulf %155, %156 : vector<8x32xf32>
    %158 = vector.broadcast %137 : vector<1x32xf32> to vector<8x32xf32>
    %159 = arith.addf %157, %158 : vector<8x32xf32>
    %160 = arith.truncf %159 : vector<8x32xf32> to vector<8x32xbf16>
    %cst_58 = arith.constant 0.000000e+00 : f32
    %161 = vector.broadcast %cst_58 : f32 to vector<8x32xf32>
    %c0_59 = arith.constant 0 : index
    %c0_60 = arith.constant 0 : index
    %162 = vector.load %arg11[%c0_59, %c0_60] : memref<32x64xbf16, #tpu.memory_space<vmem>>, vector<32x64xbf16>
    %cst_61 = arith.constant dense<0.000000e+00> : vector<8x64xf32>
    %163 = tpu.matmul %160, %162, %cst_61 {dimension_numbers = #tpu.dot_dimension_numbers<[1], [0], [0], [1], [0, 0, 1, 1], [], []>} : vector<8x32xbf16>, vector<32x64xbf16>, vector<8x64xf32> -> vector<8x64xf32>
    %c0_62 = arith.constant 0 : index
    %c0_63 = arith.constant 0 : index
    %164 = vector.load %arg12[%c0_62, %c0_63] : memref<1x64xf32, #tpu.memory_space<vmem>>, vector<1x64xf32>
    %165 = vector.broadcast %164 : vector<1x64xf32> to vector<8x64xf32>
    %166 = arith.addf %163, %165 : vector<8x64xf32>
    %167 = arith.mulf %166, %166 : vector<8x64xf32>
    %168 = arith.mulf %166, %167 : vector<8x64xf32>
    %cst_64 = arith.constant 4.471500e-02 : f32
    %169 = vector.broadcast %cst_64 : f32 to vector<8x64xf32>
    %170 = arith.mulf %169, %168 : vector<8x64xf32>
    %171 = arith.addf %166, %170 : vector<8x64xf32>
    %cst_65 = arith.constant 0.797884583 : f32
    %172 = vector.broadcast %cst_65 : f32 to vector<8x64xf32>
    %173 = arith.mulf %172, %171 : vector<8x64xf32>
    %174 = math.tanh %173 : vector<8x64xf32>
    %cst_66 = arith.constant 1.000000e+00 : f32
    %175 = vector.broadcast %cst_66 : f32 to vector<8x64xf32>
    %176 = arith.addf %175, %174 : vector<8x64xf32>
    %cst_67 = arith.constant 5.000000e-01 : f32
    %177 = vector.broadcast %cst_67 : f32 to vector<8x64xf32>
    %178 = arith.mulf %177, %176 : vector<8x64xf32>
    %179 = arith.mulf %166, %178 : vector<8x64xf32>
    %180 = arith.truncf %179 : vector<8x64xf32> to vector<8x64xbf16>
    %c0_68 = arith.constant 0 : index
    %c0_69 = arith.constant 0 : index
    %181 = vector.load %arg13[%c0_68, %c0_69] : memref<64x32xbf16, #tpu.memory_space<vmem>>, vector<64x32xbf16>
    %cst_70 = arith.constant dense<0.000000e+00> : vector<8x32xf32>
    %182 = tpu.matmul %180, %181, %cst_70 {dimension_numbers = #tpu.dot_dimension_numbers<[1], [0], [0], [1], [0, 0, 1, 1], [], []>} : vector<8x64xbf16>, vector<64x32xbf16>, vector<8x32xf32> -> vector<8x32xf32>
    %183 = arith.addf %161, %182 : vector<8x32xf32>
    %184 = arith.addf %159, %183 : vector<8x32xf32>
    %c0_71 = arith.constant 0 : index
    %c0_72 = arith.constant 0 : index
    %185 = vector.load %arg14[%c0_71, %c0_72] : memref<1x32xf32, #tpu.memory_space<vmem>>, vector<1x32xf32>
    %186 = vector.broadcast %185 : vector<1x32xf32> to vector<8x32xf32>
    %187 = arith.addf %184, %186 : vector<8x32xf32>
    %c0_73 = arith.constant 0 : index
    %c0_74 = arith.constant 0 : index
    %188 = vector.load %arg15[%c0_73, %c0_74] : memref<1x32xf32, #tpu.memory_space<vmem>>, vector<1x32xf32>
    %c0_75 = arith.constant 0 : index
    %c0_76 = arith.constant 0 : index
    %189 = vector.load %arg16[%c0_75, %c0_76] : memref<1x32xf32, #tpu.memory_space<vmem>>, vector<1x32xf32>
    %cst_77 = arith.constant dense<0.000000e+00> : vector<8xf32>
    %190 = vector.multi_reduction <add>, %187, %cst_77 [1] : vector<8x32xf32> to vector<8xf32>
    %191 = vector.shape_cast %190 : vector<8xf32> to vector<8x1xf32>
    %cst_78 = arith.constant 3.200000e+01 : f32
    %192 = vector.broadcast %cst_78 : f32 to vector<8x1xf32>
    %193 = arith.divf %191, %192 : vector<8x1xf32>
    %194 = vector.broadcast %193 : vector<8x1xf32> to vector<8x32xf32>
    %195 = arith.subf %187, %194 : vector<8x32xf32>
    %196 = arith.mulf %195, %195 : vector<8x32xf32>
    %cst_79 = arith.constant dense<0.000000e+00> : vector<8xf32>
    %197 = vector.multi_reduction <add>, %196, %cst_79 [1] : vector<8x32xf32> to vector<8xf32>
    %198 = vector.shape_cast %197 : vector<8xf32> to vector<8x1xf32>
    %cst_80 = arith.constant 3.200000e+01 : f32
    %199 = vector.broadcast %cst_80 : f32 to vector<8x1xf32>
    %200 = arith.divf %198, %199 : vector<8x1xf32>
    %201 = vector.broadcast %193 : vector<8x1xf32> to vector<8x32xf32>
    %202 = arith.subf %187, %201 : vector<8x32xf32>
    %cst_81 = arith.constant 9.99999996E-13 : f32
    %203 = vector.broadcast %cst_81 : f32 to vector<8x1xf32>
    %204 = arith.addf %200, %203 : vector<8x1xf32>
    %205 = math.rsqrt %204 : vector<8x1xf32>
    %206 = vector.broadcast %205 : vector<8x1xf32> to vector<8x32xf32>
    %207 = arith.mulf %202, %206 : vector<8x32xf32>
    %208 = vector.broadcast %188 : vector<1x32xf32> to vector<8x32xf32>
    %209 = arith.mulf %207, %208 : vector<8x32xf32>
    %210 = vector.broadcast %189 : vector<1x32xf32> to vector<8x32xf32>
    %211 = arith.addf %209, %210 : vector<8x32xf32>
    %212 = arith.truncf %211 : vector<8x32xf32> to vector<8x32xbf16>
    %c0_82 = arith.constant 0 : index
    %c0_83 = arith.constant 0 : index
    %c0_84 = arith.constant 0 : index
    %213 = vector.load %arg17[%c0_82, %c0_83, %c0_84] : memref<1x8x32xbf16, #tpu.memory_space<vmem>>, vector<1x8x32xbf16>
    %214 = vector.shape_cast %213 : vector<1x8x32xbf16> to vector<8x32xbf16>
    %215 = vector.shape_cast %212 : vector<8x32xbf16> to vector<1x8x32xbf16>
    tpu.vector_store %arg17[%c0_82, %c0_83, %c0_84], %215 {strides = array<i32>} : memref<1x8x32xbf16, #tpu.memory_space<vmem>>, vector<1x8x32xbf16>,
    return
  }
  func.func @transform_0(%arg0: i32) -> (i32, i32, i32) {
    %c0_i32 = arith.constant 0 : i32
    %c0_i32_0 = arith.constant 0 : i32
    %c0_i32_1 = arith.constant 0 : i32
    return %arg0, %c0_i32, %c0_i32_0 : i32, i32, i32
  }
  func.func @transform_1(%arg0: i32) -> (i32, i32, i32) {
    %c0_i32 = arith.constant 0 : i32
    %c0_i32_0 = arith.constant 0 : i32
    %c0_i32_1 = arith.constant 0 : i32
    return %arg0, %c0_i32, %c0_i32_0 : i32, i32, i32
  }
  func.func @transform_2(%arg0: i32) -> (i32, i32) {
    %c0_i32 = arith.constant 0 : i32
    %c0_i32_0 = arith.constant 0 : i32
    %c0_i32_1 = arith.constant 0 : i32
    return %c0_i32, %c0_i32_0 : i32, i32
  }
  func.func @transform_3(%arg0: i32) -> (i32, i32) {
    %c0_i32 = arith.constant 0 : i32
    %c0_i32_0 = arith.constant 0 : i32
    %c0_i32_1 = arith.constant 0 : i32
    return %c0_i32, %c0_i32_0 : i32, i32
  }
  func.func @transform_4(%arg0: i32) -> (i32, i32) {
    %c0_i32 = arith.constant 0 : i32
    %c0_i32_0 = arith.constant 0 : i32
    %c0_i32_1 = arith.constant 0 : i32
    return %c0_i32, %c0_i32_0 : i32, i32
  }
  func.func @transform_5(%arg0: i32) -> (i32, i32) {
    %c0_i32 = arith.constant 0 : i32
    %c0_i32_0 = arith.constant 0 : i32
    %c0_i32_1 = arith.constant 0 : i32
    return %c0_i32, %c0_i32_0 : i32, i32
  }
  func.func @transform_6(%arg0: i32) -> (i32, i32) {
    %c0_i32 = arith.constant 0 : i32
    %c0_i32_0 = arith.constant 0 : i32
    %c0_i32_1 = arith.constant 0 : i32
    return %c0_i32, %c0_i32_0 : i32, i32
  }
  func.func @transform_7(%arg0: i32) -> (i32, i32) {
    %c0_i32 = arith.constant 0 : i32
    %c0_i32_0 = arith.constant 0 : i32
    %c0_i32_1 = arith.constant 0 : i32
    return %c0_i32, %c0_i32_0 : i32, i32
  }
  func.func @transform_8(%arg0: i32) -> (i32, i32) {
    %c0_i32 = arith.constant 0 : i32
    %c0_i32_0 = arith.constant 0 : i32
    %c0_i32_1 = arith.constant 0 : i32
    return %c0_i32, %c0_i32_0 : i32, i32
  }
  func.func @transform_9(%arg0: i32) -> (i32, i32) {
    %c0_i32 = arith.constant 0 : i32
    %c0_i32_0 = arith.constant 0 : i32
    %c0_i32_1 = arith.constant 0 : i32
    return %c0_i32, %c0_i32_0 : i32, i32
  }
  func.func @transform_10(%arg0: i32) -> (i32, i32) {
    %c0_i32 = arith.constant 0 : i32
    %c0_i32_0 = arith.constant 0 : i32
    %c0_i32_1 = arith.constant 0 : i32
    return %c0_i32, %c0_i32_0 : i32, i32
  }
  func.func @transform_11(%arg0: i32) -> (i32, i32) {
    %c0_i32 = arith.constant 0 : i32
    %c0_i32_0 = arith.constant 0 : i32
    %c0_i32_1 = arith.constant 0 : i32
    return %c0_i32, %c0_i32_0 : i32, i32
  }
  func.func @transform_12(%arg0: i32) -> (i32, i32) {
    %c0_i32 = arith.constant 0 : i32
    %c0_i32_0 = arith.constant 0 : i32
    %c0_i32_1 = arith.constant 0 : i32
    return %c0_i32, %c0_i32_0 : i32, i32
  }
  func.func @transform_13(%arg0: i32) -> (i32, i32) {
    %c0_i32 = arith.constant 0 : i32
    %c0_i32_0 = arith.constant 0 : i32
    %c0_i32_1 = arith.constant 0 : i32
    return %c0_i32, %c0_i32_0 : i32, i32
  }
  func.func @transform_14(%arg0: i32) -> (i32, i32) {
    %c0_i32 = arith.constant 0 : i32
    %c0_i32_0 = arith.constant 0 : i32
    %c0_i32_1 = arith.constant 0 : i32
    return %c0_i32, %c0_i32_0 : i32, i32
  }
  func.func @transform_15(%arg0: i32) -> (i32, i32) {
    %c0_i32 = arith.constant 0 : i32
    %c0_i32_0 = arith.constant 0 : i32
    %c0_i32_1 = arith.constant 0 : i32
    return %c0_i32, %c0_i32_0 : i32, i32
  }
  func.func @transform_16(%arg0: i32) -> (i32, i32, i32) {
    %c0_i32 = arith.constant 0 : i32
    %c0_i32_0 = arith.constant 0 : i32
    %c0_i32_1 = arith.constant 0 : i32
    return %arg0, %c0_i32, %c0_i32_0 : i32, i32, i32
  }
}

</mosaic_0001>

<llo_original>
// kernel: tpu_custom_call.1
$region0: #{tpu_custom_call.1}
  #allocation0 [shape = 'u32[]', space=smem, size = 0x4, offset = 0x4, fixed_abs, tag = 'smem constant byte address 0x4 - core index']
  #allocation1 [shape = 'u32[144,128]{1,0:T(1,128)}', space=vmem, size = 0x12000, scoped, tag = 'internal scratch']
  #allocation2 [shape = 'bf16[8,32]{1,0:T(8,128)(2,1)}', space=vmem, size = 0x800, scoped, tag = 'scratch operand']
  %s0 = inlined_call_operand.hbm [shape: bf16[2,8,32], index: 0, kind: input, shape index: {}]
  %s1 = inlined_call_operand.vmem [shape: f32[2,1,8], index: 1, kind: input, shape index: {}]
  %s2 = inlined_call_operand.vmem [shape: f32[1,32], index: 2, kind: input, shape index: {}]
  %s3 = inlined_call_operand.vmem [shape: f32[1,32], index: 3, kind: input, shape index: {}]
  %s4 = inlined_call_operand.vmem [shape: bf16[32,96], index: 4, kind: input, shape index: {}]
  %s5 = inlined_call_operand.vmem [shape: f32[1,96], index: 5, kind: input, shape index: {}]
  %s6 = inlined_call_operand.vmem [shape: bf16[32,32], index: 6, kind: input, shape index: {}]
  %s7 = inlined_call_operand.vmem [shape: f32[1,32], index: 7, kind: input, shape index: {}]
  %s8 = inlined_call_operand.vmem [shape: f32[1,32], index: 8, kind: input, shape index: {}]
  %s9 = inlined_call_operand.vmem [shape: f32[1,32], index: 9, kind: input, shape index: {}]
  %s10 = inlined_call_operand.vmem [shape: bf16[32,64], index: 10, kind: input, shape index: {}]
  %s11 = inlined_call_operand.vmem [shape: f32[1,64], index: 11, kind: input, shape index: {}]
  %s12 = inlined_call_operand.vmem [shape: bf16[64,32], index: 12, kind: input, shape index: {}]
  %s13 = inlined_call_operand.vmem [shape: f32[1,32], index: 13, kind: input, shape index: {}]
  %s14 = inlined_call_operand.vmem [shape: f32[1,32], index: 14, kind: input, shape index: {}]
  %s15 = inlined_call_operand.vmem [shape: f32[1,32], index: 15, kind: input, shape index: {}]
  %s16 = inlined_call_operand.hbm [shape: bf16[2,8,32], index: 16, kind: output, shape index: {}]
  %s17 = sld [smem:[#allocation0]]
  $region101: #{tpu_custom_call.1} parent=0
    _
  %s19 = ssub.s32 1, %s17
  %s20 = scalar_select 0, %s19, %s17
  $region1: #{tpu_custom_call.1} parent=0
    #allocation3 [shape = 'u8[4096]{0}', space=vmem, size = 0x1000, scoped, tag = 'input window, operand 0']
    #allocation4 [shape = 's32[2]{0}', space=sflag, size = 0x8, scoped, tag = 'scoped memory for tpu_custom_call.1']
    #allocation5 [shape = 's32[2]{0}', space=sflag, size = 0x8, scoped, tag = 'scoped memory for tpu_custom_call.1']
    #allocation6 [shape = 'u8[4096]{0}', space=vmem, size = 0x1000, scoped, tag = 'output window, operand 0']
    %21 = vsyncpa [#allocation4], 0
    %s22 = scalar_lea.sflag [#allocation4], 1
    %23 = vsyncpa %s22, 0
    %24 = vsyncpa [#allocation5], 0
    %s25 = scalar_lea.sflag [#allocation5], 1
    %26 = vsyncpa %s25, 0
    loop: start=0, step=1, limit=4
    $region2: #{tpu_custom_call.1} parent=1 // loop_pre_header
      _
    $region3: #{tpu_custom_call.1} parent=1 // loop_header
      %s28 = sphi 0, %s32
      %p29 = scmp.ge.s32.totalorder %s28, 4
      %s38 = sphi 0, %s40
      %s41 = sphi 0, %s38
      %s42 = sphi 0, %s41
      %s58 = sphi 0, %s42
      %s64 = sphi 0, %s66
      %s67 = sphi 0, %s64
      %s68 = sphi 0, %s67
      %s84 = sphi 0, %s68
      %s88 = sphi 0, %s88
      %s90 = sphi 0, %s88
      %s91 = sphi 0, %s90
      %s105 = sphi 0, %s91
      %s109 = sphi 0, %s109
      %s111 = sphi 0, %s109
      %s112 = sphi 0, %s111
      %s126 = sphi 0, %s112
      %s130 = sphi 0, %s130
      %s132 = sphi 0, %s130
      %s133 = sphi 0, %s132
      %s147 = sphi 0, %s133
      %s151 = sphi 0, %s151
      %s153 = sphi 0, %s151
      %s154 = sphi 0, %s153
      %s168 = sphi 0, %s154
      %s172 = sphi 0, %s172
      %s174 = sphi 0, %s172
      %s175 = sphi 0, %s174
      %s189 = sphi 0, %s175
      %s193 = sphi 0, %s193
      %s195 = sphi 0, %s193
      %s196 = sphi 0, %s195
      %s210 = sphi 0, %s196
      %s214 = sphi 0, %s214
      %s216 = sphi 0, %s214
      %s217 = sphi 0, %s216
      %s231 = sphi 0, %s217
      %s235 = sphi 0, %s235
      %s237 = sphi 0, %s235
      %s238 = sphi 0, %s237
      %s252 = sphi 0, %s238
      %s256 = sphi 0, %s256
      %s258 = sphi 0, %s256
      %s259 = sphi 0, %s258
      %s273 = sphi 0, %s259
      %s277 = sphi 0, %s277
      %s279 = sphi 0, %s277
      %s280 = sphi 0, %s279
      %s294 = sphi 0, %s280
      %s298 = sphi 0, %s298
      %s300 = sphi 0, %s298
      %s301 = sphi 0, %s300
      %s315 = sphi 0, %s301
      %s319 = sphi 0, %s319
      %s321 = sphi 0, %s319
      %s322 = sphi 0, %s321
      %s336 = sphi 0, %s322
      %s340 = sphi 0, %s340
      %s342 = sphi 0, %s340
      %s343 = sphi 0, %s342
      %s357 = sphi 0, %s343
      %s361 = sphi 0, %s361
      %s363 = sphi 0, %s361
      %s364 = sphi 0, %s363
      %s378 = sphi 0, %s364
      %s384 = sphi 0, %s386
      %s387 = sphi 0, %s384
      %s388 = sphi 0, %s387
      %s404 = sphi 0, %s388
    $region4: #{tpu_custom_call.1} parent=1 // loop_header_branch
      %31 = sbr.rel (%p29) target = $region8
    $region5: #{tpu_custom_call.1} parent=1 // loop_body
      %s33 = ssub.s32 %s28, 1
      %s34 = ssub.s32 %s28, 2
      %s35 = sadd.s32 %s28, 1
      %s36 = ssub.s32 %s28, %s35
      %p37 = scmp.eq.s32.totalorder %s36, 0
      %s39 = sadd.s32 %s38, 1
      %s40 = scalar_select %p37, %s38, %s39
      %p43 = pneg %p37
      %p44 = scmp.eq.s32.totalorder %s28, 1
      %p45 = por %p43, %p44
      %p46 = scmp.ne.s32.totalorder %s38, %s41
      %p47 = scmp.eq.s32.totalorder %s28, 0
      %p48 = por %p46, %p47
      %p49 = scmp.ne.s32.totalorder %s38, %s41
      %p50 = scmp.eq.s32.totalorder %s33, 1
      %p51 = por %p49, %p50
      %p52 = scmp.ne.s32.totalorder %s41, %s42
      %p53 = scmp.eq.s32.totalorder %s33, 0
      %p54 = por %p52, %p53
      %p55 = scmp.ne.s32.totalorder %s41, %s42
      %p56 = scmp.eq.s32.totalorder %s34, 1
      %p57 = por %p55, %p56
      %p59 = scmp.ne.s32.totalorder %s42, %s58
      %p60 = scmp.eq.s32.totalorder %s34, 0
      %p61 = por %p59, %p60
      %s62 = ssub.s32 %s28, %s35
      %p63 = scmp.eq.s32.totalorder %s62, 0
      %s65 = sadd.s32 %s64, 1
      %s66 = scalar_select %p63, %s64, %s65
      %p69 = pneg %p63
      %p70 = scmp.eq.s32.totalorder %s28, 1
      %p71 = por %p69, %p70
      %p72 = scmp.ne.s32.totalorder %s64, %s67
      %p73 = scmp.eq.s32.totalorder %s28, 0
      %p74 = por %p72, %p73
      %p75 = scmp.ne.s32.totalorder %s64, %s67
      %p76 = scmp.eq.s32.totalorder %s33, 1
      %p77 = por %p75, %p76
      %p78 = scmp.ne.s32.totalorder %s67, %s68
      %p79 = scmp.eq.s32.totalorder %s33, 0
      %p80 = por %p78, %p79
      %p81 = scmp.ne.s32.totalorder %s67, %s68
      %p82 = scmp.eq.s32.totalorder %s34, 1
      %p83 = por %p81, %p82
      %p85 = scmp.ne.s32.totalorder %s68, %s84
      %p86 = scmp.eq.s32.totalorder %s34, 0
      %p87 = por %p85, %p86
      %s89 = sadd.s32 %s88, 1
      %p92 = scmp.eq.s32.totalorder %s28, 1
      %p93 = scmp.ne.s32.totalorder %s88, %s90
      %p94 = scmp.eq.s32.totalorder %s28, 0
      %p95 = por %p93, %p94
      %p96 = scmp.ne.s32.totalorder %s88, %s90
      %p97 = scmp.eq.s32.totalorder %s33, 1
      %p98 = por %p96, %p97
      %p99 = scmp.ne.s32.totalorder %s90, %s91
      %p100 = scmp.eq.s32.totalorder %s33, 0
      %p101 = por %p99, %p100
      %p102 = scmp.ne.s32.totalorder %s90, %s91
      %p103 = scmp.eq.s32.totalorder %s34, 1
      %p104 = por %p102, %p103
      %p106 = scmp.ne.s32.totalorder %s91, %s105
      %p107 = scmp.eq.s32.totalorder %s34, 0
      %p108 = por %p106, %p107
      %s110 = sadd.s32 %s109, 1
      %p113 = scmp.eq.s32.totalorder %s28, 1
      %p114 = scmp.ne.s32.totalorder %s109, %s111
      %p115 = scmp.eq.s32.totalorder %s28, 0
      %p116 = por %p114, %p115
      %p117 = scmp.ne.s32.totalorder %s109, %s111
      %p118 = scmp.eq.s32.totalorder %s33, 1
      %p119 = por %p117, %p118
      %p120 = scmp.ne.s32.totalorder %s111, %s112
      %p121 = scmp.eq.s32.totalorder %s33, 0
      %p122 = por %p120, %p121
      %p123 = scmp.ne.s32.totalorder %s111, %s112
      %p124 = scmp.eq.s32.totalorder %s34, 1
      %p125 = por %p123, %p124
      %p127 = scmp.ne.s32.totalorder %s112, %s126
      %p128 = scmp.eq.s32.totalorder %s34, 0
      %p129 = por %p127, %p128
      %s131 = sadd.s32 %s130, 1
      %p134 = scmp.eq.s32.totalorder %s28, 1
      %p135 = scmp.ne.s32.totalorder %s130, %s132
      %p136 = scmp.eq.s32.totalorder %s28, 0
      %p137 = por %p135, %p136
      %p138 = scmp.ne.s32.totalorder %s130, %s132
      %p139 = scmp.eq.s32.totalorder %s33, 1
      %p140 = por %p138, %p139
      %p141 = scmp.ne.s32.totalorder %s132, %s133
      %p142 = scmp.eq.s32.totalorder %s33, 0
      %p143 = por %p141, %p142
      %p144 = scmp.ne.s32.totalorder %s132, %s133
      %p145 = scmp.eq.s32.totalorder %s34, 1
      %p146 = por %p144, %p145
      %p148 = scmp.ne.s32.totalorder %s133, %s147
      %p149 = scmp.eq.s32.totalorder %s34, 0
      %p150 = por %p148, %p149
      %s152 = sadd.s32 %s151, 1
      %p155 = scmp.eq.s32.totalorder %s28, 1
      %p156 = scmp.ne.s32.totalorder %s151, %s153
      %p157 = scmp.eq.s32.totalorder %s28, 0
      %p158 = por %p156, %p157
      %p159 = scmp.ne.s32.totalorder %s151, %s153
      %p160 = scmp.eq.s32.totalorder %s33, 1
      %p161 = por %p159, %p160
      %p162 = scmp.ne.s32.totalorder %s153, %s154
      %p163 = scmp.eq.s32.totalorder %s33, 0
      %p164 = por %p162, %p163
      %p165 = scmp.ne.s32.totalorder %s153, %s154
      %p166 = scmp.eq.s32.totalorder %s34, 1
      %p167 = por %p165, %p166
      %p169 = scmp.ne.s32.totalorder %s154, %s168
      %p170 = scmp.eq.s32.totalorder %s34, 0
      %p171 = por %p169, %p170
      %s173 = sadd.s32 %s172, 1
      %p176 = scmp.eq.s32.totalorder %s28, 1
      %p177 = scmp.ne.s32.totalorder %s172, %s174
      %p178 = scmp.eq.s32.totalorder %s28, 0
      %p179 = por %p177, %p178
      %p180 = scmp.ne.s32.totalorder %s172, %s174
      %p181 = scmp.eq.s32.totalorder %s33, 1
      %p182 = por %p180, %p181
      %p183 = scmp.ne.s32.totalorder %s174, %s175
      %p184 = scmp.eq.s32.totalorder %s33, 0
      %p185 = por %p183, %p184
      %p186 = scmp.ne.s32.totalorder %s174, %s175
      %p187 = scmp.eq.s32.totalorder %s34, 1
      %p188 = por %p186, %p187
      %p190 = scmp.ne.s32.totalorder %s175, %s189
      %p191 = scmp.eq.s32.totalorder %s34, 0
      %p192 = por %p190, %p191
      %s194 = sadd.s32 %s193, 1
      %p197 = scmp.eq.s32.totalorder %s28, 1
      %p198 = scmp.ne.s32.totalorder %s193, %s195
      %p199 = scmp.eq.s32.totalorder %s28, 0
      %p200 = por %p198, %p199
      %p201 = scmp.ne.s32.totalorder %s193, %s195
      %p202 = scmp.eq.s32.totalorder %s33, 1
      %p203 = por %p201, %p202
      %p204 = scmp.ne.s32.totalorder %s195, %s196
      %p205 = scmp.eq.s32.totalorder %s33, 0
      %p206 = por %p204, %p205
      %p207 = scmp.ne.s32.totalorder %s195, %s196
      %p208 = scmp.eq.s32.totalorder %s34, 1
      %p209 = por %p207, %p208
      %p211 = scmp.ne.s32.totalorder %s196, %s210
      %p212 = scmp.eq.s32.totalorder %s34, 0
      %p213 = por %p211, %p212
      %s215 = sadd.s32 %s214, 1
      %p218 = scmp.eq.s32.totalorder %s28, 1
      %p219 = scmp.ne.s32.totalorder %s214, %s216
      %p220 = scmp.eq.s32.totalorder %s28, 0
      %p221 = por %p219, %p220
      %p222 = scmp.ne.s32.totalorder %s214, %s216
      %p223 = scmp.eq.s32.totalorder %s33, 1
      %p224 = por %p222, %p223
      %p225 = scmp.ne.s32.totalorder %s216, %s217
      %p226 = scmp.eq.s32.totalorder %s33, 0
      %p227 = por %p225, %p226
      %p228 = scmp.ne.s32.totalorder %s216, %s217
      %p229 = scmp.eq.s32.totalorder %s34, 1
      %p230 = por %p228, %p229
      %p232 = scmp.ne.s32.totalorder %s217, %s231
      %p233 = scmp.eq.s32.totalorder %s34, 0
      %p234 = por %p232, %p233
      %s236 = sadd.s32 %s235, 1
      %p239 = scmp.eq.s32.totalorder %s28, 1
      %p240 = scmp.ne.s32.totalorder %s235, %s237
      %p241 = scmp.eq.s32.totalorder %s28, 0
      %p242 = por %p240, %p241
      %p243 = scmp.ne.s32.totalorder %s235, %s237
      %p244 = scmp.eq.s32.totalorder %s33, 1
      %p245 = por %p243, %p244
      %p246 = scmp.ne.s32.totalorder %s237, %s238
      %p247 = scmp.eq.s32.totalorder %s33, 0
      %p248 = por %p246, %p247
      %p249 = scmp.ne.s32.totalorder %s237, %s238
      %p250 = scmp.eq.s32.totalorder %s34, 1
      %p251 = por %p249, %p250
      %p253 = scmp.ne.s32.totalorder %s238, %s252
      %p254 = scmp.eq.s32.totalorder %s34, 0
      %p255 = por %p253, %p254
      %s257 = sadd.s32 %s256, 1
      %p260 = scmp.eq.s32.totalorder %s28, 1
      %p261 = scmp.ne.s32.totalorder %s256, %s258
      %p262 = scmp.eq.s32.totalorder %s28, 0
      %p263 = por %p261, %p262
      %p264 = scmp.ne.s32.totalorder %s256, %s258
      %p265 = scmp.eq.s32.totalorder %s33, 1
      %p266 = por %p264, %p265
      %p267 = scmp.ne.s32.totalorder %s258, %s259
      %p268 = scmp.eq.s32.totalorder %s33, 0
      %p269 = por %p267, %p268
      %p270 = scmp.ne.s32.totalorder %s258, %s259
      %p271 = scmp.eq.s32.totalorder %s34, 1
      %p272 = por %p270, %p271
      %p274 = scmp.ne.s32.totalorder %s259, %s273
      %p275 = scmp.eq.s32.totalorder %s34, 0
      %p276 = por %p274, %p275
      %s278 = sadd.s32 %s277, 1
      %p281 = scmp.eq.s32.totalorder %s28, 1
      %p282 = scmp.ne.s32.totalorder %s277, %s279
      %p283 = scmp.eq.s32.totalorder %s28, 0
      %p284 = por %p282, %p283
      %p285 = scmp.ne.s32.totalorder %s277, %s279
      %p286 = scmp.eq.s32.totalorder %s33, 1
      %p287 = por %p285, %p286
      %p288 = scmp.ne.s32.totalorder %s279, %s280
      %p289 = scmp.eq.s32.totalorder %s33, 0
      %p290 = por %p288, %p289
      %p291 = scmp.ne.s32.totalorder %s279, %s280
      %p292 = scmp.eq.s32.totalorder %s34, 1
      %p293 = por %p291, %p292
      %p295 = scmp.ne.s32.totalorder %s280, %s294
      %p296 = scmp.eq.s32.totalorder %s34, 0
      %p297 = por %p295, %p296
      %s299 = sadd.s32 %s298, 1
      %p302 = scmp.eq.s32.totalorder %s28, 1
      %p303 = scmp.ne.s32.totalorder %s298, %s300
      %p304 = scmp.eq.s32.totalorder %s28, 0
      %p305 = por %p303, %p304
      %p306 = scmp.ne.s32.totalorder %s298, %s300
      %p307 = scmp.eq.s32.totalorder %s33, 1
      %p308 = por %p306, %p307
      %p309 = scmp.ne.s32.totalorder %s300, %s301
      %p310 = scmp.eq.s32.totalorder %s33, 0
      %p311 = por %p309, %p310
      %p312 = scmp.ne.s32.totalorder %s300, %s301
      %p313 = scmp.eq.s32.totalorder %s34, 1
      %p314 = por %p312, %p313
      %p316 = scmp.ne.s32.totalorder %s301, %s315
      %p317 = scmp.eq.s32.totalorder %s34, 0
      %p318 = por %p316, %p317
      %s320 = sadd.s32 %s319, 1
      %p323 = scmp.eq.s32.totalorder %s28, 1
      %p324 = scmp.ne.s32.totalorder %s319, %s321
      %p325 = scmp.eq.s32.totalorder %s28, 0
      %p326 = por %p324, %p325
      %p327 = scmp.ne.s32.totalorder %s319, %s321
      %p328 = scmp.eq.s32.totalorder %s33, 1
      %p329 = por %p327, %p328
      %p330 = scmp.ne.s32.totalorder %s321, %s322
      %p331 = scmp.eq.s32.totalorder %s33, 0
      %p332 = por %p330, %p331
      %p333 = scmp.ne.s32.totalorder %s321, %s322
      %p334 = scmp.eq.s32.totalorder %s34, 1
      %p335 = por %p333, %p334
      %p337 = scmp.ne.s32.totalorder %s322, %s336
      %p338 = scmp.eq.s32.totalorder %s34, 0
      %p339 = por %p337, %p338
      %s341 = sadd.s32 %s340, 1
      %p344 = scmp.eq.s32.totalorder %s28, 1
      %p345 = scmp.ne.s32.totalorder %s340, %s342
      %p346 = scmp.eq.s32.totalorder %s28, 0
      %p347 = por %p345, %p346
      %p348 = scmp.ne.s32.totalorder %s340, %s342
      %p349 = scmp.eq.s32.totalorder %s33, 1
      %p350 = por %p348, %p349
      %p351 = scmp.ne.s32.totalorder %s342, %s343
      %p352 = scmp.eq.s32.totalorder %s33, 0
      %p353 = por %p351, %p352
      %p354 = scmp.ne.s32.totalorder %s342, %s343
      %p355 = scmp.eq.s32.totalorder %s34, 1
      %p356 = por %p354, %p355
      %p358 = scmp.ne.s32.totalorder %s343, %s357
      %p359 = scmp.eq.s32.totalorder %s34, 0
      %p360 = por %p358, %p359
      %s362 = sadd.s32 %s361, 1
      %p365 = scmp.eq.s32.totalorder %s28, 1
      %p366 = scmp.ne.s32.totalorder %s361, %s363
      %p367 = scmp.eq.s32.totalorder %s28, 0
      %p368 = por %p366, %p367
      %p369 = scmp.ne.s32.totalorder %s361, %s363
      %p370 = scmp.eq.s32.totalorder %s33, 1
      %p371 = por %p369, %p370
      %p372 = scmp.ne.s32.totalorder %s363, %s364
      %p373 = scmp.eq.s32.totalorder %s33, 0
      %p374 = por %p372, %p373
      %p375 = scmp.ne.s32.totalorder %s363, %s364
      %p376 = scmp.eq.s32.totalorder %s34, 1
      %p377 = por %p375, %p376
      %p379 = scmp.ne.s32.totalorder %s364, %s378
      %p380 = scmp.eq.s32.totalorder %s34, 0
      %p381 = por %p379, %p380
      %s382 = ssub.s32 %s28, %s35
      %p383 = scmp.eq.s32.totalorder %s382, 0
      %s385 = sadd.s32 %s384, 1
      %s386 = scalar_select %p383, %s384, %s385
      %p389 = pneg %p383
      %p390 = scmp.eq.s32.totalorder %s28, 1
      %p391 = por %p389, %p390
      %p392 = scmp.ne.s32.totalorder %s384, %s387
      %p393 = scmp.eq.s32.totalorder %s28, 0
      %p394 = por %p392, %p393
      %p395 = scmp.ne.s32.totalorder %s384, %s387
      %p396 = scmp.eq.s32.totalorder %s33, 1
      %p397 = por %p395, %p396
      %p398 = scmp.ne.s32.totalorder %s387, %s388
      %p399 = scmp.eq.s32.totalorder %s33, 0
      %p400 = por %p398, %p399
      %p401 = scmp.ne.s32.totalorder %s387, %s388
      %p402 = scmp.eq.s32.totalorder %s34, 1
      %p403 = por %p401, %p402
      %p405 = scmp.ne.s32.totalorder %s388, %s404
      %p406 = scmp.eq.s32.totalorder %s34, 0
      %p407 = por %p405, %p406
      %p408 = scmp.le.s32.totalorder 1, %s28
      %p409 = scmp.lt.s32.totalorder %s28, 3
      %p410 = pnand %p408, %p409
      %p411 = pneg %p410
      // Predicated region
      $region9: #{tpu_custom_call.1} parent=5 // pred_check
        _
      $region10: #{tpu_custom_call.1} parent=5 // pred_check_branch
        %413 = sbr.rel (%p410) target = $region12
      $region11: #{tpu_custom_call.1} parent=5 // pred_region
        %s414 = ssub.s32 %s28, 1
        // Predicated region
        $region13: #{tpu_custom_call.1} parent=11 // pred_check
          %p415 = pneg %p101
        $region14: #{tpu_custom_call.1} parent=11 // pred_check_branch
          %417 = sbr.rel (%p415) target = $region16
        $region15: #{tpu_custom_call.1} parent=11 // pred_region
          _
        $region16: #{tpu_custom_call.1} parent=11 // pred_fallthru
          _
        // Predicated region
        $region17: #{tpu_custom_call.1} parent=11 // pred_check
          %p418 = pneg %p122
        $region18: #{tpu_custom_call.1} parent=11 // pred_check_branch
          %420 = sbr.rel (%p418) target = $region20
        $region19: #{tpu_custom_call.1} parent=11 // pred_region
          _
        $region20: #{tpu_custom_call.1} parent=11 // pred_fallthru
          _
        // Predicated region
        $region21: #{tpu_custom_call.1} parent=11 // pred_check
          %p421 = pneg %p143
        $region22: #{tpu_custom_call.1} parent=11 // pred_check_branch
          %423 = sbr.rel (%p421) target = $region24
        $region23: #{tpu_custom_call.1} parent=11 // pred_region
          _
        $region24: #{tpu_custom_call.1} parent=11 // pred_fallthru
          _
        // Predicated region
        $region25: #{tpu_custom_call.1} parent=11 // pred_check
          %p424 = pneg %p164
        $region26: #{tpu_custom_call.1} parent=11 // pred_check_branch
          %426 = sbr.rel (%p424) target = $region28
        $region27: #{tpu_custom_call.1} parent=11 // pred_region
          _
        $region28: #{tpu_custom_call.1} parent=11 // pred_fallthru
          _
        // Predicated region
        $region29: #{tpu_custom_call.1} parent=11 // pred_check
          %p427 = pneg %p185
        $region30: #{tpu_custom_call.1} parent=11 // pred_check_branch
          %429 = sbr.rel (%p427) target = $region32
        $region31: #{tpu_custom_call.1} parent=11 // pred_region
          _
        $region32: #{tpu_custom_call.1} parent=11 // pred_fallthru
          _
        // Predicated region
        $region33: #{tpu_custom_call.1} parent=11 // pred_check
          %p430 = pneg %p206
        $region34: #{tpu_custom_call.1} parent=11 // pred_check_branch
          %432 = sbr.rel (%p430) target = $region36
        $region35: #{tpu_custom_call.1} parent=11 // pred_region
          _
        $region36: #{tpu_custom_call.1} parent=11 // pred_fallthru
          _
        // Predicated region
        $region37: #{tpu_custom_call.1} parent=11 // pred_check
          %p433 = pneg %p227
        $region38: #{tpu_custom_call.1} parent=11 // pred_check_branch
          %435 = sbr.rel (%p433) target = $region40
        $region39: #{tpu_custom_call.1} parent=11 // pred_region
          _
        $region40: #{tpu_custom_call.1} parent=11 // pred_fallthru
          _
        // Predicated region
        $region41: #{tpu_custom_call.1} parent=11 // pred_check
          %p436 = pneg %p248
        $region42: #{tpu_custom_call.1} parent=11 // pred_check_branch
          %438 = sbr.rel (%p436) target = $region44
        $region43: #{tpu_custom_call.1} parent=11 // pred_region
          _
        $region44: #{tpu_custom_call.1} parent=11 // pred_fallthru
          _
        // Predicated region
        $region45: #{tpu_custom_call.1} parent=11 // pred_check
          %p439 = pneg %p269
        $region46: #{tpu_custom_call.1} parent=11 // pred_check_branch
          %441 = sbr.rel (%p439) target = $region48
        $region47: #{tpu_custom_call.1} parent=11 // pred_region
          _
        $region48: #{tpu_custom_call.1} parent=11 // pred_fallthru
          _
        // Predicated region
        $region49: #{tpu_custom_call.1} parent=11 // pred_check
          %p442 = pneg %p290
        $region50: #{tpu_custom_call.1} parent=11 // pred_check_branch
          %444 = sbr.rel (%p442) target = $region52
        $region51: #{tpu_custom_call.1} parent=11 // pred_region
          _
        $region52: #{tpu_custom_call.1} parent=11 // pred_fallthru
          _
        // Predicated region
        $region53: #{tpu_custom_call.1} parent=11 // pred_check
          %p445 = pneg %p311
        $region54: #{tpu_custom_call.1} parent=11 // pred_check_branch
          %447 = sbr.rel (%p445) target = $region56
        $region55: #{tpu_custom_call.1} parent=11 // pred_region
          _
        $region56: #{tpu_custom_call.1} parent=11 // pred_fallthru
          _
        // Predicated region
        $region57: #{tpu_custom_call.1} parent=11 // pred_check
          %p448 = pneg %p332
        $region58: #{tpu_custom_call.1} parent=11 // pred_check_branch
          %450 = sbr.rel (%p448) target = $region60
        $region59: #{tpu_custom_call.1} parent=11 // pred_region
          _
        $region60: #{tpu_custom_call.1} parent=11 // pred_fallthru
          _
        // Predicated region
        $region61: #{tpu_custom_call.1} parent=11 // pred_check
          %p451 = pneg %p353
        $region62: #{tpu_custom_call.1} parent=11 // pred_check_branch
          %453 = sbr.rel (%p451) target = $region64
        $region63: #{tpu_custom_call.1} parent=11 // pred_region
          _
        $region64: #{tpu_custom_call.1} parent=11 // pred_fallthru
          _
        // Predicated region
        $region65: #{tpu_custom_call.1} parent=11 // pred_check
          %p454 = pneg %p374
        $region66: #{tpu_custom_call.1} parent=11 // pred_check_branch
          %456 = sbr.rel (%p454) target = $region68
        $region67: #{tpu_custom_call.1} parent=11 // pred_region
          _
        $region68: #{tpu_custom_call.1} parent=11 // pred_fallthru
          _
      $region12: #{tpu_custom_call.1} parent=5 // pred_fallthru
        _
      %p457 = scmp.lt.s32.totalorder %s28, 2
      // Predicated region
      $region69: #{tpu_custom_call.1} parent=5 // pred_check
        %p458 = pneg %p457
      $region70: #{tpu_custom_call.1} parent=5 // pred_check_branch
        %460 = sbr.rel (%p458) target = $region72
      $region71: #{tpu_custom_call.1} parent=5 // pred_region
        // Predicated region
        $region73: #{tpu_custom_call.1} parent=71 // pred_check
          %p461 = pneg %p48
        $region74: #{tpu_custom_call.1} parent=71 // pred_check_branch
          %463 = sbr.rel (%p461) target = $region76
        $region75: #{tpu_custom_call.1} parent=71 // pred_region
          %s464 = sand.u32 %s38, 1
          %s465 = scalar_lea.sflag [#allocation4], %s464
          %s466 = sand.u32 %s38, 1
          %s467 = smul.addr %s466, 4
          %s468 = scalar_lea.vmem [#allocation3], %s467
          %s470 = ssub.s32 64, 64
          %471 = vsyncadd %s465, %s470
          %s472 = smul.addr %s28, 64
          %s473 = scalar_lea.hbm %s0, %s472
          %s475 = sshll.u32 %s468, 4
          %s476 = int_to_ptr.vmem [resolvable:$true] %s475
          %478 = dma.hbm_to_vmem [thread:$0]  %s473, 64, %s476, %s465
        $region76: #{tpu_custom_call.1} parent=71 // pred_fallthru
          _
        // Predicated region
        $region77: #{tpu_custom_call.1} parent=71 // pred_check
          %p479 = pneg %p74
        $region78: #{tpu_custom_call.1} parent=71 // pred_check_branch
          %481 = sbr.rel (%p479) target = $region80
        $region79: #{tpu_custom_call.1} parent=71 // pred_region
          %p482 = scmp.lt.s32.totalorder %s28, 1
          %s483 = scalar_select %p482, %s28, 1
          %s484 = scalar_lea.vmem %s1, %s483
        $region80: #{tpu_custom_call.1} parent=71 // pred_fallthru
          _
      $region72: #{tpu_custom_call.1} parent=5 // pred_fallthru
        _
      %p485 = scmp.le.s32.totalorder 1, %s28
      %p486 = scmp.lt.s32.totalorder %s28, 3
      %p487 = pnand %p485, %p486
      %p488 = pneg %p487
      // Predicated region
      $region81: #{tpu_custom_call.1} parent=5 // pred_check
        _
      $region82: #{tpu_custom_call.1} parent=5 // pred_check_branch
        %490 = sbr.rel (%p487) target = $region84
      $region83: #{tpu_custom_call.1} parent=5 // pred_region
        %s491 = ssub.s32 %s28, 1
        %s492 = sand.u32 %s41, 1
        %s493 = scalar_lea.sflag [#allocation4], %s492
        %s494 = sand.u32 %s41, 1
        %s495 = smul.addr %s494, 4
        %s496 = scalar_lea.vmem [#allocation3], %s495
        // Predicated region
        $region85: #{tpu_custom_call.1} parent=83 // pred_check
          %p497 = pneg %p54
        $region86: #{tpu_custom_call.1} parent=83 // pred_check_branch
          %499 = sbr.rel (%p497) target = $region88
        $region87: #{tpu_custom_call.1} parent=83 // pred_region
          %500 = dma.done %s493, 64
        $region88: #{tpu_custom_call.1} parent=83 // pred_fallthru
          _
        %s501 = sand.u32 %s41, 1
        %s502 = scalar_lea.sflag [#allocation4], %s501
        %s503 = sand.u32 %s41, 1
        %s504 = smul.addr %s503, 4
        %s505 = scalar_lea.vmem [#allocation3], %s504
        %p506 = pneg %p54
        %p507 = pneg %p51
        %p508 = scmp.lt.s32.totalorder %s33, 1
        %s509 = scalar_select %p508, %s33, 1
        %s510 = scalar_lea.vmem %s1, %s509
        %p511 = pneg %p80
        %p512 = pneg %p77
        %p513 = pneg %p101
        %p514 = pneg %p98
        %p515 = pneg %p122
        %p516 = pneg %p119
        %p517 = pneg %p143
        %p518 = pneg %p140
        %p519 = pneg %p164
        %p520 = pneg %p161
        %p521 = pneg %p185
        %p522 = pneg %p182
        %p523 = pneg %p206
        %p524 = pneg %p203
        %p525 = pneg %p227
        %p526 = pneg %p224
        %p527 = pneg %p248
        %p528 = pneg %p245
        %p529 = pneg %p269
        %p530 = pneg %p266
        %p531 = pneg %p290
        %p532 = pneg %p287
        %p533 = pneg %p311
        %p534 = pneg %p308
        %p535 = pneg %p332
        %p536 = pneg %p329
        %p537 = pneg %p353
        %p538 = pneg %p350
        %p539 = pneg %p374
        %p540 = pneg %p371
        %p541 = pneg %p400
        %p542 = pneg %p397
        %s543 = sand.u32 %s387, 1
        %s544 = scalar_lea.sflag [#allocation5], %s543
        %s545 = sand.u32 %s387, 1
        %s546 = smul.addr %s545, 4
        %s547 = scalar_lea.vmem [#allocation6], %s546
        %p548 = scmp.lt.s32.totalorder %s33, 1
        %s549 = scalar_select %p548, %s33, 1
        %s550 = scalar_lea.vmem %s1, %s549
        %v552 = vld [vmem:[%s496] sm:$0xf]
        %v553 = vunpack.c.l.bf16 %v552
        %v554 = vld [vmem:[%s2] sm:$0x1]
        %v555 = vld [vmem:[%s3] sm:$0x1]
        %vm556 = vcmask 261120
        %v557 = vsel %vm556, %v553, 0.0
        %558 = vadd.xlane.f32.xlu0 %v557
        %v559 = vpop.xlane.xlu0 %558
        %v560 = vrcp.pop 32.0
        %v561 = vmul.f32 %v559, %v560
        %v562 = vsub.f32 %v553, %v561
        %v563 = vmul.f32 %v562, %v562
        %v564 = vsel %vm556, %v563, 0.0
        %565 = vadd.xlane.f32.xlu0 %v564
        %v566 = vpop.xlane.xlu0 %565
        %v567 = vmul.f32 %v566, %v560
        %v568 = vadd.f32 %v567, 1e-12
        %v569 = vrsqrt.pop %v568
        %v570 = vmul.f32 %v562, %v569
        %v572 = vlaneseq
        %v573 = vshrl.u32 %v572, 7
        %v574 = vsub.s32 0, %v573
        %v575 = vrot.slane %v554, %v574
        %v577 = vmul.f32 %v570, %v575
        %v579 = vlaneseq
        %v580 = vshrl.u32 %v579, 7
        %v581 = vsub.s32 0, %v580
        %v582 = vrot.slane %v555, %v581
        %v584 = vadd.f32 %v577, %v582
        %v585 = vld [vmem:[%s550] sm:$0x1]
        %v586 = vpack.c.bf16 %v584, %v584
        %v587 = vld [vmem:[%s4] sm:$0xf]
        %v588 = vld [vmem:[%s4 + $0x4] sm:$0xf]
        %v589 = vld [vmem:[%s4 + $0x8] sm:$0xf]
        %v590 = vld [vmem:[%s4 + $0xc] sm:$0xf]
        %v591 = vld [vmem:[%s5] sm:$0x1]
        %v593 = vlaneseq
        %v594 = vshrl.u32 %v593, 7
        %v595 = vsub.s32 0, %v594
        %v596 = vrot.slane %v591, %v595
        %v602 = vunpack.c.l.b16 %v587
        %v603 = vunpack.c.l.b16 %v588
        %v604 = vunpack.c.l.b16 %v589
        %v605 = vunpack.c.l.b16 %v590
        %v606 = vpack.c.b16 %v603, %v602
        %v607 = vpack.c.b16 %v605, %v604
        %v611 = vsel %vm556, %v586, 0
        %613 = vmatprep.subr.bf16.mxu0 0
        %614 = vmatpush1.bf16.msra.mxu0 %v606
        %615 = vmatprep.subr.bf16.mxu0 0
        %616 = vmatpush1.bf16.msra.mxu0 %v607
        %617 = vmatprep.subr.bf16.mxu0 0
        %618 = vmatpush1.bf16.msra.mxu0 0
        %619 = vmatprep.subr.bf16.mxu0 0
        %620 = vmatpush1.bf16.msra.mxu0 0
        %621 = vmatprep.subr.bf16.mxu0 0
        %622 = vmatpush1.bf16.msra.mxu0 0
        %623 = vmatprep.subr.bf16.mxu0 0
        %624 = vmatpush1.bf16.msra.mxu0 0
        %625 = vmatprep.subr.bf16.mxu0 0
        %626 = vmatpush1.bf16.msra.mxu0 0
        %627 = vmatprep.subr.bf16.mxu0 0
        %628 = vmatpush1.bf16.msra.mxu0 0
        %629 = vmatprep.subr.bf16.mxu0 0
        %630 = vmatpush1.bf16.msra.mxu0 0
        %631 = vmatprep.subr.bf16.mxu0 0
        %632 = vmatpush1.bf16.msra.mxu0 0
        %633 = vmatprep.subr.bf16.mxu0 0
        %634 = vmatpush1.bf16.msra.mxu0 0
        %635 = vmatprep.subr.bf16.mxu0 0
        %636 = vmatpush1.bf16.msra.mxu0 0
        %637 = vmatprep.subr.bf16.mxu0 0
        %638 = vmatpush1.bf16.msra.mxu0 0
        %639 = vmatprep.subr.bf16.mxu0 0
        %640 = vmatpush1.bf16.msra.mxu0 0
        %641 = vmatprep.subr.bf16.mxu0 0
        %642 = vmatpush1.bf16.msra.mxu0 0
        %643 = vmatprep.subr.bf16.mxu0 0
        %644 = vmatpush1.bf16.msra.mxu0 0
        %645 = vmatprep.mubr.bf16.mxu0 0
        %646 = vmatmul.mubr.bf16.gmra.mrb[0].mxu0 %v611
        %v647 = vpop.f32.mrb[0].mxu0
        %v648 = vadd.f32 %v596, %v647
        %v649 = vpop.f32.mrb[0].mxu0
        %v650 = vpop.f32.mrb[0].mxu0
        %v651 = vpop.f32.mrb[0].mxu0
        %652 = vdwg.mxu0
        %v653 = vmul.f32 %v648, 0.35355338
        %v654 = vpack.c.bf16 %v653, %v653
        %v655 = vpack.c.bf16 %v648, %v648
        %v656 = vsub.f32 %v585, 1.0
        %v657 = vmul.f32 %v656, 1e+30
        %v659 = vlaneseq
        %v660 = vshrl.u32 %v659, 7
        %v661 = vsub.s32 0, %v660
        %v662 = vrot.slane %v657, %v661
        %665 = vrot.lane.b32.xlu0 %v655, 96
        %v666 = vpop.permute.xlu0 %665
        %vm667 = vcmask 64512
        %v669 = vsel %vm667, %v654, 0
        %v672 = vsel %vm667, %v666, 0
        %674 = vmatprep.subr.bf16.mxu0 0
        %675 = vmatpush1.bf16.xpose.msra.mxu0 %v672
        %676 = vmatprep.subr.bf16.mxu0 0
        %677 = vmatpush1.bf16.xpose.msra.mxu0 0
        %678 = vmatprep.subr.bf16.mxu0 0
        %679 = vmatpush1.bf16.xpose.msra.mxu0 0
        %680 = vmatprep.subr.bf16.mxu0 0
        %681 = vmatpush1.bf16.xpose.msra.mxu0 0
        %682 = vmatprep.subr.bf16.mxu0 0
        %683 = vmatpush1.bf16.xpose.msra.mxu0 0
        %684 = vmatprep.subr.bf16.mxu0 0
        %685 = vmatpush1.bf16.xpose.msra.mxu0 0
        %686 = vmatprep.subr.bf16.mxu0 0
        %687 = vmatpush1.bf16.xpose.msra.mxu0 0
        %688 = vmatprep.subr.bf16.mxu0 0
        %689 = vmatpush1.bf16.xpose.msra.mxu0 0
        %690 = vmatprep.subr.bf16.mxu0 0
        %691 = vmatpush1.bf16.xpose.msra.mxu0 0
        %692 = vmatprep.subr.bf16.mxu0 0
        %693 = vmatpush1.bf16.xpose.msra.mxu0 0
        %694 = vmatprep.subr.bf16.mxu0 0
        %695 = vmatpush1.bf16.xpose.msra.mxu0 0
        %696 = vmatprep.subr.bf16.mxu0 0
        %697 = vmatpush1.bf16.xpose.msra.mxu0 0
        %698 = vmatprep.subr.bf16.mxu0 0
        %699 = vmatpush1.bf16.xpose.msra.mxu0 0
        %700 = vmatprep.subr.bf16.mxu0 0
        %701 = vmatpush1.bf16.xpose.msra.mxu0 0
        %702 = vmatprep.subr.bf16.mxu0 0
        %703 = vmatpush1.bf16.xpose.msra.mxu0 0
        %704 = vmatprep.subr.bf16.mxu0 0
        %705 = vmatpush1.bf16.xpose.msra.mxu0 0
        %706 = vmatprep.mubr.bf16.mxu0 0
        %707 = vmatmul.mubr.bf16.gmra.mrb[0].mxu0 %v669
        %v708 = vpop.f32.mrb[0].mxu0
        %v709 = vadd.f32 %v662, %v708
        %v710 = vpop.f32.mrb[0].mxu0
        %v711 = vpop.f32.mrb[0].mxu0
        %v712 = vpop.f32.mrb[0].mxu0
        %713 = vdwg.mxu0
        %v714 = vsel %vm667, %v709, -inf
        %715 = vmax.xlane.f32.xlu0 %v714
        %v716 = vpop.xlane.xlu0 %715
        %v717 = vsub.f32 %v709, %v716
        %v718 = vpack.c.bf16 %v717, %v717
        %v720 = vmul.bf16 %v718, 1069105081
        %v721 = vpow.bf16.pop %v720
        %v722 = vunpack.c.l.bf16 %v721
        %v723 = vsel %vm667, %v722, 0.0
        %724 = vadd.xlane.f32.xlu0 %v723
        %v725 = vpop.xlane.xlu0 %724
        %v726 = vrcp.pop %v725
        %727 = vrot.lane.b32.xlu0 %v655, 64
        %v728 = vpop.permute.xlu0 %727
        %v730 = vsel %vm667, %v721, 0
        %vm732 = vcmask 1043456
        %v734 = vsel %vm732, %v728, 0
        %736 = vmatprep.subr.bf16.mxu0 0
        %737 = vmatpush1.bf16.msra.mxu0 %v734
        %738 = vmatprep.subr.bf16.mxu0 0
        %739 = vmatpush1.bf16.msra.mxu0 0
        %740 = vmatprep.subr.bf16.mxu0 0
        %741 = vmatpush1.bf16.msra.mxu0 0
        %742 = vmatprep.subr.bf16.mxu0 0
        %743 = vmatpush1.bf16.msra.mxu0 0
        %744 = vmatprep.subr.bf16.mxu0 0
        %745 = vmatpush1.bf16.msra.mxu0 0
        %746 = vmatprep.subr.bf16.mxu0 0
        %747 = vmatpush1.bf16.msra.mxu0 0
        %748 = vmatprep.subr.bf16.mxu0 0
        %749 = vmatpush1.bf16.msra.mxu0 0
        %750 = vmatprep.subr.bf16.mxu0 0
        %751 = vmatpush1.bf16.msra.mxu0 0
        %752 = vmatprep.subr.bf16.mxu0 0
        %753 = vmatpush1.bf16.msra.mxu0 0
        %754 = vmatprep.subr.bf16.mxu0 0
        %755 = vmatpush1.bf16.msra.mxu0 0
        %756 = vmatprep.subr.bf16.mxu0 0
        %757 = vmatpush1.bf16.msra.mxu0 0
        %758 = vmatprep.subr.bf16.mxu0 0
        %759 = vmatpush1.bf16.msra.mxu0 0
        %760 = vmatprep.subr.bf16.mxu0 0
        %761 = vmatpush1.bf16.msra.mxu0 0
        %762 = vmatprep.subr.bf16.mxu0 0
        %763 = vmatpush1.bf16.msra.mxu0 0
        %764 = vmatprep.subr.bf16.mxu0 0
        %765 = vmatpush1.bf16.msra.mxu0 0
        %766 = vmatprep.subr.bf16.mxu0 0
        %767 = vmatpush1.bf16.msra.mxu0 0
        %768 = vmatprep.mubr.bf16.mxu0 0
        %769 = vmatmul.mubr.bf16.gmra.mrb[0].mxu0 %v730
        %v770 = vpop.f32.mrb[0].mxu0
        %v771 = vadd.f32 0.0, %v770
        %v772 = vpop.f32.mrb[0].mxu0
        %v773 = vpop.f32.mrb[0].mxu0
        %v774 = vpop.f32.mrb[0].mxu0
        %775 = vdwg.mxu0
        %v776 = vmul.f32 %v771, %v726
        %v777 = vpack.c.bf16 %v776, %v776
        %vm778 = vcmask 60416
        %779 = vst.msk [vmem:[#allocation2] sm:$0xf] %vm778, %v777
        %781 = vrot.lane.b32.xlu0 %v654, 120
        %v782 = vpop.permute.xlu0 %781
        %783 = vrot.lane.b32.xlu0 %v655, 88
        %v784 = vpop.permute.xlu0 %783
        %v786 = vsel %vm667, %v782, 0
        %v789 = vsel %vm667, %v784, 0
        %791 = vmatprep.subr.bf16.mxu0 0
        %792 = vmatpush1.bf16.xpose.msra.mxu0 %v789
        %793 = vmatprep.subr.bf16.mxu0 0
        %794 = vmatpush1.bf16.xpose.msra.mxu0 0
        %795 = vmatprep.subr.bf16.mxu0 0
        %796 = vmatpush1.bf16.xpose.msra.mxu0 0
        %797 = vmatprep.subr.bf16.mxu0 0
        %798 = vmatpush1.bf16.xpose.msra.mxu0 0
        %799 = vmatprep.subr.bf16.mxu0 0
        %800 = vmatpush1.bf16.xpose.msra.mxu0 0
        %801 = vmatprep.subr.bf16.mxu0 0
        %802 = vmatpush1.bf16.xpose.msra.mxu0 0
        %803 = vmatprep.subr.bf16.mxu0 0
        %804 = vmatpush1.bf16.xpose.msra.mxu0 0
        %805 = vmatprep.subr.bf16.mxu0 0
        %806 = vmatpush1.bf16.xpose.msra.mxu0 0
        %807 = vmatprep.subr.bf16.mxu0 0
        %808 = vmatpush1.bf16.xpose.msra.mxu0 0
        %809 = vmatprep.subr.bf16.mxu0 0
        %810 = vmatpush1.bf16.xpose.msra.mxu0 0
        %811 = vmatprep.subr.bf16.mxu0 0
        %812 = vmatpush1.bf16.xpose.msra.mxu0 0
        %813 = vmatprep.subr.bf16.mxu0 0
        %814 = vmatpush1.bf16.xpose.msra.mxu0 0
        %815 = vmatprep.subr.bf16.mxu0 0
        %816 = vmatpush1.bf16.xpose.msra.mxu0 0
        %817 = vmatprep.subr.bf16.mxu0 0
        %818 = vmatpush1.bf16.xpose.msra.mxu0 0
        %819 = vmatprep.subr.bf16.mxu0 0
        %820 = vmatpush1.bf16.xpose.msra.mxu0 0
        %821 = vmatprep.subr.bf16.mxu0 0
        %822 = vmatpush1.bf16.xpose.msra.mxu0 0
        %823 = vmatprep.mubr.bf16.mxu0 0
        %824 = vmatmul.mubr.bf16.gmra.mrb[0].mxu0 %v786
        %v825 = vpop.f32.mrb[0].mxu0
        %v826 = vadd.f32 %v662, %v825
        %v827 = vpop.f32.mrb[0].mxu0
        %v828 = vpop.f32.mrb[0].mxu0
        %v829 = vpop.f32.mrb[0].mxu0
        %830 = vdwg.mxu0
        %v831 = vsel %vm667, %v826, -inf
        %832 = vmax.xlane.f32.xlu0 %v831
        %v833 = vpop.xlane.xlu0 %832
        %v834 = vsub.f32 %v826, %v833
        %v835 = vpack.c.bf16 %v834, %v834
        %v837 = vmul.bf16 %v835, 1069105081
        %v838 = vpow.bf16.pop %v837
        %v839 = vunpack.c.l.bf16 %v838
        %v840 = vsel %vm667, %v839, 0.0
        %841 = vadd.xlane.f32.xlu0 %v840
        %v842 = vpop.xlane.xlu0 %841
        %v843 = vrcp.pop %v842
        %844 = vrot.lane.b32.xlu0 %v655, 56
        %v845 = vpop.permute.xlu0 %844
        %v847 = vsel %vm667, %v838, 0
        %v850 = vsel %vm732, %v845, 0
        %852 = vmatprep.subr.bf16.mxu0 0
        %853 = vmatpush1.bf16.msra.mxu0 %v850
        %854 = vmatprep.subr.bf16.mxu0 0
        %855 = vmatpush1.bf16.msra.mxu0 0
        %856 = vmatprep.subr.bf16.mxu0 0
        %857 = vmatpush1.bf16.msra.mxu0 0
        %858 = vmatprep.subr.bf16.mxu0 0
        %859 = vmatpush1.bf16.msra.mxu0 0
        %860 = vmatprep.subr.bf16.mxu0 0
        %861 = vmatpush1.bf16.msra.mxu0 0
        %862 = vmatprep.subr.bf16.mxu0 0
        %863 = vmatpush1.bf16.msra.mxu0 0
        %864 = vmatprep.subr.bf16.mxu0 0
        %865 = vmatpush1.bf16.msra.mxu0 0
        %866 = vmatprep.subr.bf16.mxu0 0
        %867 = vmatpush1.bf16.msra.mxu0 0
        %868 = vmatprep.subr.bf16.mxu0 0
        %869 = vmatpush1.bf16.msra.mxu0 0
        %870 = vmatprep.subr.bf16.mxu0 0
        %871 = vmatpush1.bf16.msra.mxu0 0
        %872 = vmatprep.subr.bf16.mxu0 0
        %873 = vmatpush1.bf16.msra.mxu0 0
        %874 = vmatprep.subr.bf16.mxu0 0
        %875 = vmatpush1.bf16.msra.mxu0 0
        %876 = vmatprep.subr.bf16.mxu0 0
        %877 = vmatpush1.bf16.msra.mxu0 0
        %878 = vmatprep.subr.bf16.mxu0 0
        %879 = vmatpush1.bf16.msra.mxu0 0
        %880 = vmatprep.subr.bf16.mxu0 0
        %881 = vmatpush1.bf16.msra.mxu0 0
        %882 = vmatprep.subr.bf16.mxu0 0
        %883 = vmatpush1.bf16.msra.mxu0 0
        %884 = vmatprep.mubr.bf16.mxu0 0
        %885 = vmatmul.mubr.bf16.gmra.mrb[0].mxu0 %v847
        %v886 = vpop.f32.mrb[0].mxu0
        %v887 = vadd.f32 0.0, %v886
        %v888 = vpop.f32.mrb[0].mxu0
        %v889 = vpop.f32.mrb[0].mxu0
        %v890 = vpop.f32.mrb[0].mxu0
        %891 = vdwg.mxu0
        %v892 = vmul.f32 %v887, %v843
        %v893 = vpack.c.bf16 %v892, %v892
        %v895 = vunpack.c.l.b16 %v893
        %v896 = vpack.c.b16 %v895, %v895
        %897 = vrot.lane.b32.xlu0 %v896, 8
        %v898 = vpop.permute.xlu0 %897
        %vm900 = vcmask 126016
        %901 = vst.msk [vmem:[#allocation2] sm:$0xf] %vm900, %v898
        %902 = vrot.lane.b32.xlu0 %v654, 112
        %v903 = vpop.permute.xlu0 %902
        %904 = vrot.lane.b32.xlu0 %v655, 80
        %v905 = vpop.permute.xlu0 %904
        %v907 = vsel %vm667, %v903, 0
        %v910 = vsel %vm667, %v905, 0
        %912 = vmatprep.subr.bf16.mxu0 0
        %913 = vmatpush1.bf16.xpose.msra.mxu0 %v910
        %914 = vmatprep.subr.bf16.mxu0 0
        %915 = vmatpush1.bf16.xpose.msra.mxu0 0
        %916 = vmatprep.subr.bf16.mxu0 0
        %917 = vmatpush1.bf16.xpose.msra.mxu0 0
        %918 = vmatprep.subr.bf16.mxu0 0
        %919 = vmatpush1.bf16.xpose.msra.mxu0 0
        %920 = vmatprep.subr.bf16.mxu0 0
        %921 = vmatpush1.bf16.xpose.msra.mxu0 0
        %922 = vmatprep.subr.bf16.mxu0 0
        %923 = vmatpush1.bf16.xpose.msra.mxu0 0
        %924 = vmatprep.subr.bf16.mxu0 0
        %925 = vmatpush1.bf16.xpose.msra.mxu0 0
        %926 = vmatprep.subr.bf16.mxu0 0
        %927 = vmatpush1.bf16.xpose.msra.mxu0 0
        %928 = vmatprep.subr.bf16.mxu0 0
        %929 = vmatpush1.bf16.xpose.msra.mxu0 0
        %930 = vmatprep.subr.bf16.mxu0 0
        %931 = vmatpush1.bf16.xpose.msra.mxu0 0
        %932 = vmatprep.subr.bf16.mxu0 0
        %933 = vmatpush1.bf16.xpose.msra.mxu0 0
        %934 = vmatprep.subr.bf16.mxu0 0
        %935 = vmatpush1.bf16.xpose.msra.mxu0 0
        %936 = vmatprep.subr.bf16.mxu0 0
        %937 = vmatpush1.bf16.xpose.msra.mxu0 0
        %938 = vmatprep.subr.bf16.mxu0 0
        %939 = vmatpush1.bf16.xpose.msra.mxu0 0
        %940 = vmatprep.subr.bf16.mxu0 0
        %941 = vmatpush1.bf16.xpose.msra.mxu0 0
        %942 = vmatprep.subr.bf16.mxu0 0
        %943 = vmatpush1.bf16.xpose.msra.mxu0 0
        %944 = vmatprep.mubr.bf16.mxu0 0
        %945 = vmatmul.mubr.bf16.gmra.mrb[0].mxu0 %v907
        %v946 = vpop.f32.mrb[0].mxu0
        %v947 = vadd.f32 %v662, %v946
        %v948 = vpop.f32.mrb[0].mxu0
        %v949 = vpop.f32.mrb[0].mxu0
        %v950 = vpop.f32.mrb[0].mxu0
        %951 = vdwg.mxu0
        %v952 = vsel %vm667, %v947, -inf
        %953 = vmax.xlane.f32.xlu0 %v952
        %v954 = vpop.xlane.xlu0 %953
        %v955 = vsub.f32 %v947, %v954
        %v956 = vpack.c.bf16 %v955, %v955
        %v958 = vmul.bf16 %v956, 1069105081
        %v959 = vpow.bf16.pop %v958
        %v960 = vunpack.c.l.bf16 %v959
        %v961 = vsel %vm667, %v960, 0.0
        %962 = vadd.xlane.f32.xlu0 %v961
        %v963 = vpop.xlane.xlu0 %962
        %v964 = vrcp.pop %v963
        %965 = vrot.lane.b32.xlu0 %v655, 48
        %v966 = vpop.permute.xlu0 %965
        %v968 = vsel %vm667, %v959, 0
        %v971 = vsel %vm732, %v966, 0
        %973 = vmatprep.subr.bf16.mxu0 0
        %974 = vmatpush1.bf16.msra.mxu0 %v971
        %975 = vmatprep.subr.bf16.mxu0 0
        %976 = vmatpush1.bf16.msra.mxu0 0
        %977 = vmatprep.subr.bf16.mxu0 0
        %978 = vmatpush1.bf16.msra.mxu0 0
        %979 = vmatprep.subr.bf16.mxu0 0
        %980 = vmatpush1.bf16.msra.mxu0 0
        %981 = vmatprep.subr.bf16.mxu0 0
        %982 = vmatpush1.bf16.msra.mxu0 0
        %983 = vmatprep.subr.bf16.mxu0 0
        %984 = vmatpush1.bf16.msra.mxu0 0
        %985 = vmatprep.subr.bf16.mxu0 0
        %986 = vmatpush1.bf16.msra.mxu0 0
        %987 = vmatprep.subr.bf16.mxu0 0
        %988 = vmatpush1.bf16.msra.mxu0 0
        %989 = vmatprep.subr.bf16.mxu0 0
        %990 = vmatpush1.bf16.msra.mxu0 0
        %991 = vmatprep.subr.bf16.mxu0 0
        %992 = vmatpush1.bf16.msra.mxu0 0
        %993 = vmatprep.subr.bf16.mxu0 0
        %994 = vmatpush1.bf16.msra.mxu0 0
        %995 = vmatprep.subr.bf16.mxu0 0
        %996 = vmatpush1.bf16.msra.mxu0 0
        %997 = vmatprep.subr.bf16.mxu0 0
        %998 = vmatpush1.bf16.msra.mxu0 0
        %999 = vmatprep.subr.bf16.mxu0 0
        %1000 = vmatpush1.bf16.msra.mxu0 0
        %1001 = vmatprep.subr.bf16.mxu0 0
        %1002 = vmatpush1.bf16.msra.mxu0 0
        %1003 = vmatprep.subr.bf16.mxu0 0
        %1004 = vmatpush1.bf16.msra.mxu0 0
        %1005 = vmatprep.mubr.bf16.mxu0 0
        %1006 = vmatmul.mubr.bf16.gmra.mrb[0].mxu0 %v968
        %v1007 = vpop.f32.mrb[0].mxu0
        %v1008 = vadd.f32 0.0, %v1007
        %v1009 = vpop.f32.mrb[0].mxu0
        %v1010 = vpop.f32.mrb[0].mxu0
        %v1011 = vpop.f32.mrb[0].mxu0
        %1012 = vdwg.mxu0
        %v1013 = vmul.f32 %v1008, %v964
        %v1014 = vpack.c.bf16 %v1013, %v1013
        %v1016 = vunpack.c.l.b16 %v1014
        %v1017 = vpack.c.b16 %v1016, %v1016
        %1018 = vrot.lane.b32.xlu0 %v1017, 16
        %v1019 = vpop.permute.xlu0 %1018
        %vm1021 = vcmask 191616
        %1022 = vst.msk [vmem:[#allocation2] sm:$0xf] %vm1021, %v1019
        %1023 = vrot.lane.b32.xlu0 %v654, 104
        %v1024 = vpop.permute.xlu0 %1023
        %1025 = vrot.lane.b32.xlu0 %v655, 72
        %v1026 = vpop.permute.xlu0 %1025
        %v1028 = vsel %vm667, %v1024, 0
        %v1031 = vsel %vm667, %v1026, 0
        %1033 = vmatprep.subr.bf16.mxu0 0
        %1034 = vmatpush1.bf16.xpose.msra.mxu0 %v1031
        %1035 = vmatprep.subr.bf16.mxu0 0
        %1036 = vmatpush1.bf16.xpose.msra.mxu0 0
        %1037 = vmatprep.subr.bf16.mxu0 0
        %1038 = vmatpush1.bf16.xpose.msra.mxu0 0
        %1039 = vmatprep.subr.bf16.mxu0 0
        %1040 = vmatpush1.bf16.xpose.msra.mxu0 0
        %1041 = vmatprep.subr.bf16.mxu0 0
        %1042 = vmatpush1.bf16.xpose.msra.mxu0 0
        %1043 = vmatprep.subr.bf16.mxu0 0
        %1044 = vmatpush1.bf16.xpose.msra.mxu0 0
        %1045 = vmatprep.subr.bf16.mxu0 0
        %1046 = vmatpush1.bf16.xpose.msra.mxu0 0
        %1047 = vmatprep.subr.bf16.mxu0 0
        %1048 = vmatpush1.bf16.xpose.msra.mxu0 0
        %1049 = vmatprep.subr.bf16.mxu0 0
        %1050 = vmatpush1.bf16.xpose.msra.mxu0 0
        %1051 = vmatprep.subr.bf16.mxu0 0
        %1052 = vmatpush1.bf16.xpose.msra.mxu0 0
        %1053 = vmatprep.subr.bf16.mxu0 0
        %1054 = vmatpush1.bf16.xpose.msra.mxu0 0
        %1055 = vmatprep.subr.bf16.mxu0 0
        %1056 = vmatpush1.bf16.xpose.msra.mxu0 0
        %1057 = vmatprep.subr.bf16.mxu0 0
        %1058 = vmatpush1.bf16.xpose.msra.mxu0 0
        %1059 = vmatprep.subr.bf16.mxu0 0
        %1060 = vmatpush1.bf16.xpose.msra.mxu0 0
        %1061 = vmatprep.subr.bf16.mxu0 0
        %1062 = vmatpush1.bf16.xpose.msra.mxu0 0
        %1063 = vmatprep.subr.bf16.mxu0 0
        %1064 = vmatpush1.bf16.xpose.msra.mxu0 0
        %1065 = vmatprep.mubr.bf16.mxu0 0
        %1066 = vmatmul.mubr.bf16.gmra.mrb[0].mxu0 %v1028
        %v1067 = vpop.f32.mrb[0].mxu0
        %v1068 = vadd.f32 %v662, %v1067
        %v1069 = vpop.f32.mrb[0].mxu0
        %v1070 = vpop.f32.mrb[0].mxu0
        %v1071 = vpop.f32.mrb[0].mxu0
        %1072 = vdwg.mxu0
        %v1073 = vsel %vm667, %v1068, -inf
        %1074 = vmax.xlane.f32.xlu0 %v1073
        %v1075 = vpop.xlane.xlu0 %1074
        %v1076 = vsub.f32 %v1068, %v1075
        %v1077 = vpack.c.bf16 %v1076, %v1076
        %v1079 = vmul.bf16 %v1077, 1069105081
        %v1080 = vpow.bf16.pop %v1079
        %v1081 = vunpack.c.l.bf16 %v1080
        %v1082 = vsel %vm667, %v1081, 0.0
        %1083 = vadd.xlane.f32.xlu0 %v1082
        %v1084 = vpop.xlane.xlu0 %1083
        %v1085 = vrcp.pop %v1084
        %1086 = vrot.lane.b32.xlu0 %v655, 40
        %v1087 = vpop.permute.xlu0 %1086
        %v1089 = vsel %vm667, %v1080, 0
        %v1092 = vsel %vm732, %v1087, 0
        %1094 = vmatprep.subr.bf16.mxu0 0
        %1095 = vmatpush1.bf16.msra.mxu0 %v1092
        %1096 = vmatprep.subr.bf16.mxu0 0
        %1097 = vmatpush1.bf16.msra.mxu0 0
        %1098 = vmatprep.subr.bf16.mxu0 0
        %1099 = vmatpush1.bf16.msra.mxu0 0
        %1100 = vmatprep.subr.bf16.mxu0 0
        %1101 = vmatpush1.bf16.msra.mxu0 0
        %1102 = vmatprep.subr.bf16.mxu0 0
        %1103 = vmatpush1.bf16.msra.mxu0 0
        %1104 = vmatprep.subr.bf16.mxu0 0
        %1105 = vmatpush1.bf16.msra.mxu0 0
        %1106 = vmatprep.subr.bf16.mxu0 0
        %1107 = vmatpush1.bf16.msra.mxu0 0
        %1108 = vmatprep.subr.bf16.mxu0 0
        %1109 = vmatpush1.bf16.msra.mxu0 0
        %1110 = vmatprep.subr.bf16.mxu0 0
        %1111 = vmatpush1.bf16.msra.mxu0 0
        %1112 = vmatprep.subr.bf16.mxu0 0
        %1113 = vmatpush1.bf16.msra.mxu0 0
        %1114 = vmatprep.subr.bf16.mxu0 0
        %1115 = vmatpush1.bf16.msra.mxu0 0
        %1116 = vmatprep.subr.bf16.mxu0 0
        %1117 = vmatpush1.bf16.msra.mxu0 0
        %1118 = vmatprep.subr.bf16.mxu0 0
        %1119 = vmatpush1.bf16.msra.mxu0 0
        %1120 = vmatprep.subr.bf16.mxu0 0
        %1121 = vmatpush1.bf16.msra.mxu0 0
        %1122 = vmatprep.subr.bf16.mxu0 0
        %1123 = vmatpush1.bf16.msra.mxu0 0
        %1124 = vmatprep.subr.bf16.mxu0 0
        %1125 = vmatpush1.bf16.msra.mxu0 0
        %1126 = vmatprep.mubr.bf16.mxu0 0
        %1127 = vmatmul.mubr.bf16.gmra.mrb[0].mxu0 %v1089
        %v1128 = vpop.f32.mrb[0].mxu0
        %v1129 = vadd.f32 0.0, %v1128
        %v1130 = vpop.f32.mrb[0].mxu0
        %v1131 = vpop.f32.mrb[0].mxu0
        %v1132 = vpop.f32.mrb[0].mxu0
        %1133 = vdwg.mxu0
        %v1134 = vmul.f32 %v1129, %v1085
        %v1135 = vpack.c.bf16 %v1134, %v1134
        %v1137 = vunpack.c.l.b16 %v1135
        %v1138 = vpack.c.b16 %v1137, %v1137
        %1139 = vrot.lane.b32.xlu0 %v1138, 24
        %v1140 = vpop.permute.xlu0 %1139
        %vm1142 = vcmask 257216
        %1143 = vst.msk [vmem:[#allocation2] sm:$0xf] %vm1142, %v1140
        %v1144 = vld [vmem:[#allocation2] sm:$0xf]
        %v1145 = vld [vmem:[%s6] sm:$0xf]
        %v1146 = vld [vmem:[%s6 + $0x4] sm:$0xf]
        %v1147 = vld [vmem:[%s6 + $0x8] sm:$0xf]
        %v1148 = vld [vmem:[%s6 + $0xc] sm:$0xf]
        %v1149 = vld [vmem:[%s7] sm:$0x1]
        %v1151 = vlaneseq
        %v1152 = vshrl.u32 %v1151, 7
        %v1153 = vsub.s32 0, %v1152
        %v1154 = vrot.slane %v1149, %v1153
        %v1160 = vunpack.c.l.b16 %v1145
        %v1161 = vunpack.c.l.b16 %v1146
        %v1162 = vunpack.c.l.b16 %v1147
        %v1163 = vunpack.c.l.b16 %v1148
        %v1164 = vpack.c.b16 %v1161, %v1160
        %v1165 = vpack.c.b16 %v1163, %v1162
        %v1169 = vsel %vm556, %v1144, 0
        %1171 = vmatprep.subr.bf16.mxu0 0
        %1172 = vmatpush1.bf16.msra.mxu0 %v1164
        %1173 = vmatprep.subr.bf16.mxu0 0
        %1174 = vmatpush1.bf16.msra.mxu0 %v1165
        %1175 = vmatprep.subr.bf16.mxu0 0
        %1176 = vmatpush1.bf16.msra.mxu0 0
        %1177 = vmatprep.subr.bf16.mxu0 0
        %1178 = vmatpush1.bf16.msra.mxu0 0
        %1179 = vmatprep.subr.bf16.mxu0 0
        %1180 = vmatpush1.bf16.msra.mxu0 0
        %1181 = vmatprep.subr.bf16.mxu0 0
        %1182 = vmatpush1.bf16.msra.mxu0 0
        %1183 = vmatprep.subr.bf16.mxu0 0
        %1184 = vmatpush1.bf16.msra.mxu0 0
        %1185 = vmatprep.subr.bf16.mxu0 0
        %1186 = vmatpush1.bf16.msra.mxu0 0
        %1187 = vmatprep.subr.bf16.mxu0 0
        %1188 = vmatpush1.bf16.msra.mxu0 0
        %1189 = vmatprep.subr.bf16.mxu0 0
        %1190 = vmatpush1.bf16.msra.mxu0 0
        %1191 = vmatprep.subr.bf16.mxu0 0
        %1192 = vmatpush1.bf16.msra.mxu0 0
        %1193 = vmatprep.subr.bf16.mxu0 0
        %1194 = vmatpush1.bf16.msra.mxu0 0
        %1195 = vmatprep.subr.bf16.mxu0 0
        %1196 = vmatpush1.bf16.msra.mxu0 0
        %1197 = vmatprep.subr.bf16.mxu0 0
        %1198 = vmatpush1.bf16.msra.mxu0 0
        %1199 = vmatprep.subr.bf16.mxu0 0
        %1200 = vmatpush1.bf16.msra.mxu0 0
        %1201 = vmatprep.subr.bf16.mxu0 0
        %1202 = vmatpush1.bf16.msra.mxu0 0
        %1203 = vmatprep.mubr.bf16.mxu0 0
        %1204 = vmatmul.mubr.bf16.gmra.mrb[0].mxu0 %v1169
        %v1205 = vpop.f32.mrb[0].mxu0
        %v1206 = vadd.f32 %v1154, %v1205
        %v1207 = vpop.f32.mrb[0].mxu0
        %v1208 = vpop.f32.mrb[0].mxu0
        %v1209 = vpop.f32.mrb[0].mxu0
        %1210 = vdwg.mxu0
        %v1211 = vadd.f32 %v584, %v1206
        %v1212 = vld [vmem:[%s8] sm:$0x1]
        %v1213 = vld [vmem:[%s9] sm:$0x1]
        %v1214 = vsel %vm556, %v1211, 0.0
        %1215 = vadd.xlane.f32.xlu0 %v1214
        %v1216 = vpop.xlane.xlu0 %1215
        %v1217 = vmul.f32 %v1216, %v560
        %v1218 = vsub.f32 %v1211, %v1217
        %v1219 = vmul.f32 %v1218, %v1218
        %v1220 = vsel %vm556, %v1219, 0.0
        %1221 = vadd.xlane.f32.xlu0 %v1220
        %v1222 = vpop.xlane.xlu0 %1221
        %v1223 = vmul.f32 %v1222, %v560
        %v1224 = vadd.f32 %v1223, 1e-12
        %v1225 = vrsqrt.pop %v1224
        %v1226 = vmul.f32 %v1218, %v1225
        %v1228 = vlaneseq
        %v1229 = vshrl.u32 %v1228, 7
        %v1230 = vsub.s32 0, %v1229
        %v1231 = vrot.slane %v1212, %v1230
        %v1233 = vmul.f32 %v1226, %v1231
        %v1235 = vlaneseq
        %v1236 = vshrl.u32 %v1235, 7
        %v1237 = vsub.s32 0, %v1236
        %v1238 = vrot.slane %v1213, %v1237
        %v1240 = vadd.f32 %v1233, %v1238
        %v1241 = vpack.c.bf16 %v1240, %v1240
        %v1242 = vld [vmem:[%s10] sm:$0xf]
        %v1243 = vld [vmem:[%s10 + $0x4] sm:$0xf]
        %v1244 = vld [vmem:[%s10 + $0x8] sm:$0xf]
        %v1245 = vld [vmem:[%s10 + $0xc] sm:$0xf]
        %v1246 = vld [vmem:[%s11] sm:$0x1]
        %v1248 = vlaneseq
        %v1249 = vshrl.u32 %v1248, 7
        %v1250 = vsub.s32 0, %v1249
        %v1251 = vrot.slane %v1246, %v1250
        %v1257 = vunpack.c.l.b16 %v1242
        %v1258 = vunpack.c.l.b16 %v1243
        %v1259 = vunpack.c.l.b16 %v1244
        %v1260 = vunpack.c.l.b16 %v1245
        %v1261 = vpack.c.b16 %v1258, %v1257
        %v1262 = vpack.c.b16 %v1260, %v1259
        %v1266 = vsel %vm556, %v1241, 0
        %1268 = vmatprep.subr.bf16.mxu0 0
        %1269 = vmatpush1.bf16.msra.mxu0 %v1261
        %1270 = vmatprep.subr.bf16.mxu0 0
        %1271 = vmatpush1.bf16.msra.mxu0 %v1262
        %1272 = vmatprep.subr.bf16.mxu0 0
        %1273 = vmatpush1.bf16.msra.mxu0 0
        %1274 = vmatprep.subr.bf16.mxu0 0
        %1275 = vmatpush1.bf16.msra.mxu0 0
        %1276 = vmatprep.subr.bf16.mxu0 0
        %1277 = vmatpush1.bf16.msra.mxu0 0
        %1278 = vmatprep.subr.bf16.mxu0 0
        %1279 = vmatpush1.bf16.msra.mxu0 0
        %1280 = vmatprep.subr.bf16.mxu0 0
        %1281 = vmatpush1.bf16.msra.mxu0 0
        %1282 = vmatprep.subr.bf16.mxu0 0
        %1283 = vmatpush1.bf16.msra.mxu0 0
        %1284 = vmatprep.subr.bf16.mxu0 0
        %1285 = vmatpush1.bf16.msra.mxu0 0
        %1286 = vmatprep.subr.bf16.mxu0 0
        %1287 = vmatpush1.bf16.msra.mxu0 0
        %1288 = vmatprep.subr.bf16.mxu0 0
        %1289 = vmatpush1.bf16.msra.mxu0 0
        %1290 = vmatprep.subr.bf16.mxu0 0
        %1291 = vmatpush1.bf16.msra.mxu0 0
        %1292 = vmatprep.subr.bf16.mxu0 0
        %1293 = vmatpush1.bf16.msra.mxu0 0
        %1294 = vmatprep.subr.bf16.mxu0 0
        %1295 = vmatpush1.bf16.msra.mxu0 0
        %1296 = vmatprep.subr.bf16.mxu0 0
        %1297 = vmatpush1.bf16.msra.mxu0 0
        %1298 = vmatprep.subr.bf16.mxu0 0
        %1299 = vmatpush1.bf16.msra.mxu0 0
        %1300 = vmatprep.mubr.bf16.mxu0 0
        %1301 = vmatmul.mubr.bf16.gmra.mrb[0].mxu0 %v1266
        %v1302 = vpop.f32.mrb[0].mxu0
        %v1303 = vadd.f32 %v1251, %v1302
        %v1304 = vpop.f32.mrb[0].mxu0
        %v1305 = vpop.f32.mrb[0].mxu0
        %v1306 = vpop.f32.mrb[0].mxu0
        %1307 = vdwg.mxu0
        %v1308 = vmul.f32 %v1303, %v1303
        %v1309 = vmul.f32 %v1303, %v1308
        %v1310 = vmul.f32 %v1309, 0.044715
        %v1311 = vadd.f32 %v1303, %v1310
        %v1312 = vmul.f32 %v1311, 0.7978846
        %v1313 = vtanh.pop %v1312
        %v1314 = vadd.f32 %v1313, 1.0
        %v1315 = vmul.f32 %v1314, 0.5
        %v1316 = vmul.f32 %v1303, %v1315
        %v1317 = vpack.c.bf16 %v1316, %v1316
        %v1318 = vld [vmem:[%s12] sm:$0xf]
        %v1319 = vld [vmem:[%s12 + $0x4] sm:$0xf]
        %v1320 = vld [vmem:[%s12 + $0x8] sm:$0xf]
        %v1321 = vld [vmem:[%s12 + $0xc] sm:$0xf]
        %v1322 = vld [vmem:[%s12 + $0x10] sm:$0xf]
        %v1323 = vld [vmem:[%s12 + $0x14] sm:$0xf]
        %v1324 = vld [vmem:[%s12 + $0x18] sm:$0xf]
        %v1325 = vld [vmem:[%s12 + $0x1c] sm:$0xf]
        %v1334 = vunpack.c.l.b16 %v1318
        %v1335 = vunpack.c.l.b16 %v1319
        %v1336 = vunpack.c.l.b16 %v1320
        %v1337 = vunpack.c.l.b16 %v1321
        %v1338 = vunpack.c.l.b16 %v1322
        %v1339 = vunpack.c.l.b16 %v1323
        %v1340 = vunpack.c.l.b16 %v1324
        %v1341 = vunpack.c.l.b16 %v1325
        %v1342 = vpack.c.b16 %v1335, %v1334
        %v1343 = vpack.c.b16 %v1337, %v1336
        %v1344 = vpack.c.b16 %v1339, %v1338
        %v1345 = vpack.c.b16 %v1341, %v1340
        %vm1350 = vcmask 523264
        %v1352 = vsel %vm1350, %v1317, 0
        %1354 = vmatprep.subr.bf16.mxu0 0
        %1355 = vmatpush1.bf16.msra.mxu0 %v1342
        %1356 = vmatprep.subr.bf16.mxu0 0
        %1357 = vmatpush1.bf16.msra.mxu0 %v1343
        %1358 = vmatprep.subr.bf16.mxu0 0
        %1359 = vmatpush1.bf16.msra.mxu0 %v1344
        %1360 = vmatprep.subr.bf16.mxu0 0
        %1361 = vmatpush1.bf16.msra.mxu0 %v1345
        %1362 = vmatprep.subr.bf16.mxu0 0
        %1363 = vmatpush1.bf16.msra.mxu0 0
        %1364 = vmatprep.subr.bf16.mxu0 0
        %1365 = vmatpush1.bf16.msra.mxu0 0
        %1366 = vmatprep.subr.bf16.mxu0 0
        %1367 = vmatpush1.bf16.msra.mxu0 0
        %1368 = vmatprep.subr.bf16.mxu0 0
        %1369 = vmatpush1.bf16.msra.mxu0 0
        %1370 = vmatprep.subr.bf16.mxu0 0
        %1371 = vmatpush1.bf16.msra.mxu0 0
        %1372 = vmatprep.subr.bf16.mxu0 0
        %1373 = vmatpush1.bf16.msra.mxu0 0
        %1374 = vmatprep.subr.bf16.mxu0 0
        %1375 = vmatpush1.bf16.msra.mxu0 0
        %1376 = vmatprep.subr.bf16.mxu0 0
        %1377 = vmatpush1.bf16.msra.mxu0 0
        %1378 = vmatprep.subr.bf16.mxu0 0
        %1379 = vmatpush1.bf16.msra.mxu0 0
        %1380 = vmatprep.subr.bf16.mxu0 0
        %1381 = vmatpush1.bf16.msra.mxu0 0
        %1382 = vmatprep.subr.bf16.mxu0 0
        %1383 = vmatpush1.bf16.msra.mxu0 0
        %1384 = vmatprep.subr.bf16.mxu0 0
        %1385 = vmatpush1.bf16.msra.mxu0 0
        %1386 = vmatprep.mubr.bf16.mxu0 0
        %1387 = vmatmul.mubr.bf16.gmra.mrb[0].mxu0 %v1352
        %v1388 = vpop.f32.mrb[0].mxu0
        %v1389 = vadd.f32 0.0, %v1388
        %v1390 = vpop.f32.mrb[0].mxu0
        %v1391 = vpop.f32.mrb[0].mxu0
        %v1392 = vpop.f32.mrb[0].mxu0
        %1393 = vdwg.mxu0
        %v1394 = vadd.f32 %v1240, %v1389
        %v1395 = vld [vmem:[%s13] sm:$0x1]
        %v1397 = vlaneseq
        %v1398 = vshrl.u32 %v1397, 7
        %v1399 = vsub.s32 0, %v1398
        %v1400 = vrot.slane %v1395, %v1399
        %v1402 = vadd.f32 %v1394, %v1400
        %v1403 = vld [vmem:[%s14] sm:$0x1]
        %v1404 = vld [vmem:[%s15] sm:$0x1]
        %v1405 = vsel %vm556, %v1402, 0.0
        %1406 = vadd.xlane.f32.xlu0 %v1405
        %v1407 = vpop.xlane.xlu0 %1406
        %v1408 = vmul.f32 %v1407, %v560
        %v1409 = vsub.f32 %v1402, %v1408
        %v1410 = vmul.f32 %v1409, %v1409
        %v1411 = vsel %vm556, %v1410, 0.0
        %1412 = vadd.xlane.f32.xlu0 %v1411
        %v1413 = vpop.xlane.xlu0 %1412
        %v1414 = vmul.f32 %v1413, %v560
        %v1415 = vadd.f32 %v1414, 1e-12
        %v1416 = vrsqrt.pop %v1415
        %v1417 = vmul.f32 %v1409, %v1416
        %v1419 = vlaneseq
        %v1420 = vshrl.u32 %v1419, 7
        %v1421 = vsub.s32 0, %v1420
        %v1422 = vrot.slane %v1403, %v1421
        %v1424 = vmul.f32 %v1417, %v1422
        %v1426 = vlaneseq
        %v1427 = vshrl.u32 %v1426, 7
        %v1428 = vsub.s32 0, %v1427
        %v1429 = vrot.slane %v1404, %v1428
        %v1431 = vadd.f32 %v1424, %v1429
        %v1432 = vpack.c.bf16 %v1431, %v1431
        %vm1433 = vcmask 257024
        %1434 = vst.msk [vmem:[%s547] sm:$0xf] %vm1433, %v1432
        %s1435 = sand.u32 %s387, 1
        %s1436 = scalar_lea.sflag [#allocation5], %s1435
        %s1437 = sand.u32 %s387, 1
        %s1438 = smul.addr %s1437, 4
        %s1439 = scalar_lea.vmem [#allocation6], %s1438
        // Predicated region
        $region89: #{tpu_custom_call.1} parent=83 // pred_check
          %p1440 = pneg %p397
        $region90: #{tpu_custom_call.1} parent=83 // pred_check_branch
          %1442 = sbr.rel (%p1440) target = $region92
        $region91: #{tpu_custom_call.1} parent=83 // pred_region
          %s1444 = ssub.s32 64, 64
          %1445 = vsyncadd %s1436, %s1444
          %s1446 = smul.addr %s33, 64
          %s1447 = scalar_lea.hbm %s16, %s1446
          %s1449 = sshll.u32 %s1439, 4
          %s1450 = int_to_ptr.vmem [resolvable:$true] %s1449
          %1452 = dma.vmem_to_hbm [thread:$0]  %s1450, 64, %s1447, %s1436
        $region92: #{tpu_custom_call.1} parent=83 // pred_fallthru
          _
      $region84: #{tpu_custom_call.1} parent=5 // pred_fallthru
        _
      %p1453 = scmp.le.s32.totalorder 2, %s28
      // Predicated region
      $region93: #{tpu_custom_call.1} parent=5 // pred_check
        %p1454 = pneg %p1453
      $region94: #{tpu_custom_call.1} parent=5 // pred_check_branch
        %1456 = sbr.rel (%p1454) target = $region96
      $region95: #{tpu_custom_call.1} parent=5 // pred_region
        %s1457 = ssub.s32 %s28, 2
        // Predicated region
        $region97: #{tpu_custom_call.1} parent=95 // pred_check
          %p1458 = pneg %p403
        $region98: #{tpu_custom_call.1} parent=95 // pred_check_branch
          %1460 = sbr.rel (%p1458) target = $region100
        $region99: #{tpu_custom_call.1} parent=95 // pred_region
          %s1461 = sand.u32 %s388, 1
          %s1462 = scalar_lea.sflag [#allocation5], %s1461
          %s1463 = sand.u32 %s388, 1
          %s1464 = smul.addr %s1463, 4
          %s1465 = scalar_lea.vmem [#allocation6], %s1464
          %1466 = dma.done %s1462, 64
        $region100: #{tpu_custom_call.1} parent=95 // pred_fallthru
          _
      $region96: #{tpu_custom_call.1} parent=5 // pred_fallthru
        _
    $region6: #{tpu_custom_call.1} parent=1 // loop_footer
      %s32 = sadd.s32 1, %s28
    $region7: #{tpu_custom_call.1} parent=1 // loop_footer_branch
      %27 = sbr.rel target = $region3
    $region8: #{tpu_custom_call.1} parent=1 // loop_exit
      _
    %1467 = vsyncpa [#allocation4], 1
    %s1468 = scalar_lea.sflag [#allocation4], 1
    %1469 = vsyncpa %s1468, 1
    %1470 = vsyncpa [#allocation5], 1
    %s1471 = scalar_lea.sflag [#allocation5], 1
    %1472 = vsyncpa %s1471, 1

</llo_original>
